<compile_context>
chip_gen: v7x
topology: tpu7x:2x2x1
jax: 0.10.0
libtpu: 0.0.40
codegen_flags: <defaults>
</compile_context>

<pallas_src>
import functools

import jax
import jax.numpy as jnp
from jax import lax
from jax.experimental import pallas as pl
from jax.experimental.pallas import tpu as pltpu


def se_res_block_kernel(x_ref, w1_ref, b1_ref, w2_ref, b2_ref,
                        fc1_ref, fc2_ref, mask_ref, o_ref, *, width):
    # x_ref:    (1, S, HW)  S = B*C  (B images packed along sublanes, channel-minor)
    # w*_ref:   (9, S, S)   per-tap conv weights, block-diagonal over images
    # b*_ref:   (S, 1)      conv biases, tiled per image
    # fc*_ref:  (S, S)      SE FC weights, block-diagonal over images
    # mask_ref: (9, HW)     per-tap zero-padding validity masks (f32 0/1)
    S, HW = x_ref.shape[1], x_ref.shape[2]

    xf = x_ref[0]                                    # (S, HW), lane-dense

    # Hoist mask slices once; reused by both convs.
    masks_all = mask_ref[...]                        # (9, HW)
    mrow = [masks_all[t:t + 1, :] for t in range(9)]  # each (1, HW)

    def conv3x3_relu(inp, w_ref, b_ref):
        # Center tap first (no mask), then accumulate the 8 shifted taps.
        acc = jnp.dot(w_ref[4], inp, preferred_element_type=jnp.float32)
        for t in range(9):
            if t == 4:
                continue
            dh, dw = t // 3 - 1, t % 3 - 1
            s = dh * width + dw                      # static lane shift
            # out[q] = inp[(q + s) mod HW]; wrapped lanes are exactly the
            # masked border lanes (requires H >= 2, W >= 2 -- asserted in wrapper).
            shifted = pltpu.roll(inp, shift=(-s) % HW, axis=1)
            acc = acc + jnp.dot(w_ref[t], shifted * mrow[t],
                                preferred_element_type=jnp.float32)
        return jnp.maximum(acc + b_ref[...], 0.0)    # (S, HW)

    y1 = conv3x3_relu(xf, w1_ref, b1_ref)
    y2 = conv3x3_relu(y1, w2_ref, b2_ref)

    # SE layer, vectorized over all packed images:
    #   global avg pool -> fc1 -> relu -> fc2 -> sigmoid -> channel scale.
    inv_hw = 1.0 / float(HW)
    pooled = jnp.sum(y2, axis=1, keepdims=True) * inv_hw             # (S, 1)
    z = jnp.maximum(jnp.dot(fc1_ref[...], pooled,
                            preferred_element_type=jnp.float32), 0.0)
    g = jax.nn.sigmoid(jnp.dot(fc2_ref[...], z,
                               preferred_element_type=jnp.float32))  # (S, 1)

    o_ref[0] = (xf + y2 * g).astype(o_ref.dtype)     # residual, dense store


def _pick_images_per_block(N, C, HW, dtype_bytes=4):
    """Largest divisor B of N within sublane / VMEM budgets; keep >=2 grid
    steps on 2-TensorCore chips (v7x)."""
    try:
        kind = jax.devices()[0].device_kind.lower()
    except Exception:
        kind = ""
    two_tc = ("v7" in kind) or ("7x" in kind.replace(" ", ""))

    sublane_cap = 128          # cap block-diagonal weight dim (MXU M/K dim)
    vmem_budget = 8 << 20      # conservative: well under scoped-VMEM defaults

    best = 1
    for B in range(1, N + 1):
        if N % B:
            continue
        S = B * C
        if S > sublane_cap:
            break
        est = (4 * S * HW                    # double-buffered in + out blocks
               + 6 * S * HW                  # live intermediates
               + 2 * (2 * 9 + 2) * S * S     # resident (double-buffered) weights
               + 2 * 9 * HW) * dtype_bytes   # masks
        if est > vmem_budget:
            break
        best = B

    if two_tc and N // best < 2:
        # Prefer >=2 grid steps so the second v7x TensorCore is not idle.
        for B in range(best, 0, -1):
            if N % B == 0 and N // B >= 2:
                best = B
                break
    return best


def se_res_block(x_nchw, params, images_per_block=None):
    """Pallas SEResBlock. Input/output are NCHW float32, like the torch module."""
    N, C, H, W = x_nchw.shape
    HW = H * W
    assert H >= 2 and W >= 2, "masked-roll 3x3 tap construction needs H,W >= 2"

    if images_per_block is None:
        images_per_block = _pick_images_per_block(N, C, HW)
    B = images_per_block
    assert N % B == 0
    G = N // B
    S = B * C

    # FREE reshape (no transpose): (N, C, H, W) -> (G, B*C, HW).
    x_r = x_nchw.reshape(G, S, HW)

    eye_b = jnp.eye(B, dtype=jnp.float32)

    def pack_conv(w):
        # (Cout, Cin, 3, 3) OIHW -> (9, S, S): tap-major, block-diag over images.
        taps = [jnp.kron(eye_b, w[:, :, kh, kw])
                for kh in range(3) for kw in range(3)]
        return jnp.stack(taps, axis=0)

    w1 = pack_conv(params['conv1_w'])                    # (9, S, S)
    w2 = pack_conv(params['conv2_w'])                    # (9, S, S)
    b1 = jnp.tile(params['conv1_b'], B).reshape(S, 1)
    b2 = jnp.tile(params['conv2_b'], B).reshape(S, 1)
    fc1 = jnp.kron(eye_b, params['fc1_w'])               # (S, S)
    fc2 = jnp.kron(eye_b, params['fc2_w'])               # (S, S)

    # Per-tap validity masks for the implicit zero padding (shared by all
    # images / channels / both convs).  Lane-dense (9, HW).
    h_idx = jnp.arange(HW, dtype=jnp.int32) // W
    w_idx = jnp.arange(HW, dtype=jnp.int32) % W
    rows = []
    for kh in range(3):
        for kw in range(3):
            dh, dw = kh - 1, kw - 1
            valid = ((h_idx + dh >= 0) & (h_idx + dh < H) &
                     (w_idx + dw >= 0) & (w_idx + dw < W))
            rows.append(valid.astype(jnp.float32))
    masks = jnp.stack(rows, axis=0)                      # (9, HW)

    kernel = functools.partial(se_res_block_kernel, width=W)

    out_r = pl.pallas_call(
        kernel,
        out_shape=jax.ShapeDtypeStruct((G, S, HW), x_nchw.dtype),
        grid_spec=pltpu.PrefetchScalarGridSpec(
            num_scalar_prefetch=0,
            grid=(G,),
            in_specs=[
                pl.BlockSpec((1, S, HW), lambda g: (g, 0, 0)),   # x
                pl.BlockSpec((9, S, S), lambda g: (0, 0, 0)),    # w1 (resident)
                pl.BlockSpec((S, 1), lambda g: (0, 0)),          # b1
                pl.BlockSpec((9, S, S), lambda g: (0, 0, 0)),    # w2
                pl.BlockSpec((S, 1), lambda g: (0, 0)),          # b2
                pl.BlockSpec((S, S), lambda g: (0, 0)),          # fc1
                pl.BlockSpec((S, S), lambda g: (0, 0)),          # fc2
                pl.BlockSpec((9, HW), lambda g: (0, 0)),         # masks
            ],
            out_specs=pl.BlockSpec((1, S, HW), lambda g: (g, 0, 0)),
        ),
        compiler_params=pltpu.CompilerParams(
            dimension_semantics=("parallel",)),
    )(x_r, w1, b1, w2, b2, fc1, fc2, masks)

    # FREE reshape back to NCHW (row order already matches).
    return out_r.reshape(N, C, H, W)


def ref_forward(x, params):
    """Pure-JAX reference matching the PyTorch forward (NCHW)."""
    def conv(v, w, b):
        y = lax.conv_general_dilated(
            v, w, window_strides=(1, 1), padding='SAME',
            dimension_numbers=('NCHW', 'OIHW', 'NCHW'))
        return jax.nn.relu(y + b.reshape(1, -1, 1, 1))

    y = conv(x, params['conv1_w'], params['conv1_b'])
    y = conv(y, params['conv2_w'], params['conv2_b'])
    s = jnp.mean(y, axis=(2, 3))                            # (N, C)
    z = jax.nn.relu(s @ params['fc1_w'].T)
    g = jax.nn.sigmoid(z @ params['fc2_w'].T)
    return x + y * g[:, :, None, None]


if __name__ == "__main__":
    N, C, H, W = 2, 4, 16, 16          # planes = 4, reduction = 1
    key = jax.random.PRNGKey(0)
    ks = jax.random.split(key, 7)
    params = {
        'conv1_w': jax.random.normal(ks[0], (C, C, 3, 3), jnp.float32) * 0.1,
        'conv1_b': jax.random.normal(ks[1], (C,), jnp.float32) * 0.1,
        'conv2_w': jax.random.normal(ks[2], (C, C, 3, 3), jnp.float32) * 0.1,
        'conv2_b': jax.random.normal(ks[3], (C,), jnp.float32) * 0.1,
        # SELayer, reduction=1: Linear(C, C) -> ReLU -> Linear(C, C) -> Sigmoid
        'fc1_w': jax.random.normal(ks[4], (C, C), jnp.float32) * 0.1,
        'fc2_w': jax.random.normal(ks[5], (C, C), jnp.float32) * 0.1,
    }
    x = jax.random.normal(ks[6], (N, C, H, W), jnp.float32)

    ref = ref_forward(x, params)

    # Default heuristic (max images per step on single-TC chips; G>=2 on v7x).
    out = jax.block_until_ready(se_res_block(x, params))
    assert out.shape == x.shape and out.dtype == x.dtype
    assert jnp.allclose(out, ref, atol=1e-4, rtol=1e-4), "mismatch (default) vs reference"

    # Explicit paths: one image per step (S=4) and both images packed (S=8).
    out1 = jax.block_until_ready(se_res_block(x, params, images_per_block=1))
    assert jnp.allclose(out1, ref, atol=1e-4, rtol=1e-4), "mismatch (B=1) vs reference"

    out2 = jax.block_until_ready(se_res_block(x, params, images_per_block=2))
    assert jnp.allclose(out2, ref, atol=1e-4, rtol=1e-4), "mismatch (B=2) vs reference"

    print("KERNEL_OK")
</pallas_src>

<mosaic_0001>
module attributes {stable_mosaic.version = 11 : i64} {
  func.func @se_res_block_kernel(%arg0: i32, %arg1: memref<1x8x256xf32, #tpu.memory_space<vmem>>, %arg2: memref<9x8x8xf32, #tpu.memory_space<vmem>>, %arg3: memref<8x1xf32, #tpu.memory_space<vmem>>, %arg4: memref<9x8x8xf32, #tpu.memory_space<vmem>>, %arg5: memref<8x1xf32, #tpu.memory_space<vmem>>, %arg6: memref<8x8xf32, #tpu.memory_space<vmem>>, %arg7: memref<8x8xf32, #tpu.memory_space<vmem>>, %arg8: memref<9x256xf32, #tpu.memory_space<vmem>>, %arg9: memref<1x8x256xf32, #tpu.memory_space<vmem>>) attributes {dimension_semantics = [#tpu.dimension_semantics<parallel>], iteration_bounds = array<i64: 1>, scalar_prefetch = 0 : i64, scratch_operands = 0 : i64, tpu.core_type = #tpu.core_type<tc>, window_params = [{transform_indices = @transform_0, window_bounds = array<i64: 1, 8, 256>}, {pipeline_mode = #tpu.pipeline_mode<synchronous>, transform_indices = @transform_1, window_bounds = array<i64: 9, 8, 8>}, {pipeline_mode = #tpu.pipeline_mode<synchronous>, transform_indices = @transform_2, window_bounds = array<i64: 8, 1>}, {pipeline_mode = #tpu.pipeline_mode<synchronous>, transform_indices = @transform_3, window_bounds = array<i64: 9, 8, 8>}, {pipeline_mode = #tpu.pipeline_mode<synchronous>, transform_indices = @transform_4, window_bounds = array<i64: 8, 1>}, {pipeline_mode = #tpu.pipeline_mode<synchronous>, transform_indices = @transform_5, window_bounds = array<i64: 8, 8>}, {pipeline_mode = #tpu.pipeline_mode<synchronous>, transform_indices = @transform_6, window_bounds = array<i64: 8, 8>}, {pipeline_mode = #tpu.pipeline_mode<synchronous>, transform_indices = @transform_7, window_bounds = array<i64: 9, 256>}, {transform_indices = @transform_8, window_bounds = array<i64: 1, 8, 256>}]} {
    %c0 = arith.constant 0 : index
    %c0_0 = arith.constant 0 : index
    %c0_1 = arith.constant 0 : index
    %0 = vector.load %arg1[%c0, %c0_0, %c0_1] : memref<1x8x256xf32, #tpu.memory_space<vmem>>, vector<1x8x256xf32>
    %1 = vector.shape_cast %0 : vector<1x8x256xf32> to vector<8x256xf32>
    %c0_2 = arith.constant 0 : index
    %c0_3 = arith.constant 0 : index
    %2 = vector.load %arg8[%c0_2, %c0_3] : memref<9x256xf32, #tpu.memory_space<vmem>>, vector<9x256xf32>
    %3 = vector.extract_strided_slice %2 {offsets = [0, 0], sizes = [1, 256], strides = [1, 1]} : vector<9x256xf32> to vector<1x256xf32>
    %4 = vector.extract_strided_slice %2 {offsets = [1, 0], sizes = [1, 256], strides = [1, 1]} : vector<9x256xf32> to vector<1x256xf32>
    %5 = vector.extract_strided_slice %2 {offsets = [2, 0], sizes = [1, 256], strides = [1, 1]} : vector<9x256xf32> to vector<1x256xf32>
    %6 = vector.extract_strided_slice %2 {offsets = [3, 0], sizes = [1, 256], strides = [1, 1]} : vector<9x256xf32> to vector<1x256xf32>
    %7 = vector.extract_strided_slice %2 {offsets = [5, 0], sizes = [1, 256], strides = [1, 1]} : vector<9x256xf32> to vector<1x256xf32>
    %8 = vector.extract_strided_slice %2 {offsets = [6, 0], sizes = [1, 256], strides = [1, 1]} : vector<9x256xf32> to vector<1x256xf32>
    %9 = vector.extract_strided_slice %2 {offsets = [7, 0], sizes = [1, 256], strides = [1, 1]} : vector<9x256xf32> to vector<1x256xf32>
    %10 = vector.extract_strided_slice %2 {offsets = [8, 0], sizes = [1, 256], strides = [1, 1]} : vector<9x256xf32> to vector<1x256xf32>
    %c4 = arith.constant 4 : index
    %c0_4 = arith.constant 0 : index
    %c0_5 = arith.constant 0 : index
    %11 = vector.load %arg2[%c4, %c0_4, %c0_5] : memref<9x8x8xf32, #tpu.memory_space<vmem>>, vector<1x8x8xf32>
    %12 = vector.shape_cast %11 : vector<1x8x8xf32> to vector<8x8xf32>
    %cst = arith.constant dense<0.000000e+00> : vector<8x256xf32>
    %13 = tpu.matmul %12, %1, %cst {dimension_numbers = #tpu.dot_dimension_numbers<[1], [0], [0], [1], [0, 0, 1, 1], [], []>} : vector<8x8xf32>, vector<8x256xf32>, vector<8x256xf32> -> vector<8x256xf32>
    %c17_i32 = arith.constant 17 : i32
    %14 = tpu.dynamic_rotate %1 by %c17_i32 dim 1 : vector<8x256xf32>, i32 -> vector<8x256xf32>
    %c0_6 = arith.constant 0 : index
    %c0_7 = arith.constant 0 : index
    %c0_8 = arith.constant 0 : index
    %15 = vector.load %arg2[%c0_6, %c0_7, %c0_8] : memref<9x8x8xf32, #tpu.memory_space<vmem>>, vector<1x8x8xf32>
    %16 = vector.shape_cast %15 : vector<1x8x8xf32> to vector<8x8xf32>
    %17 = vector.broadcast %3 : vector<1x256xf32> to vector<8x256xf32>
    %18 = arith.mulf %14, %17 : vector<8x256xf32>
    %cst_9 = arith.constant dense<0.000000e+00> : vector<8x256xf32>
    %19 = tpu.matmul %16, %18, %cst_9 {dimension_numbers = #tpu.dot_dimension_numbers<[1], [0], [0], [1], [0, 0, 1, 1], [], []>} : vector<8x8xf32>, vector<8x256xf32>, vector<8x256xf32> -> vector<8x256xf32>
    %20 = arith.addf %13, %19 : vector<8x256xf32>
    %c16_i32 = arith.constant 16 : i32
    %21 = tpu.dynamic_rotate %1 by %c16_i32 dim 1 : vector<8x256xf32>, i32 -> vector<8x256xf32>
    %c1 = arith.constant 1 : index
    %c0_10 = arith.constant 0 : index
    %c0_11 = arith.constant 0 : index
    %22 = vector.load %arg2[%c1, %c0_10, %c0_11] : memref<9x8x8xf32, #tpu.memory_space<vmem>>, vector<1x8x8xf32>
    %23 = vector.shape_cast %22 : vector<1x8x8xf32> to vector<8x8xf32>
    %24 = vector.broadcast %4 : vector<1x256xf32> to vector<8x256xf32>
    %25 = arith.mulf %21, %24 : vector<8x256xf32>
    %cst_12 = arith.constant dense<0.000000e+00> : vector<8x256xf32>
    %26 = tpu.matmul %23, %25, %cst_12 {dimension_numbers = #tpu.dot_dimension_numbers<[1], [0], [0], [1], [0, 0, 1, 1], [], []>} : vector<8x8xf32>, vector<8x256xf32>, vector<8x256xf32> -> vector<8x256xf32>
    %27 = arith.addf %20, %26 : vector<8x256xf32>
    %c15_i32 = arith.constant 15 : i32
    %28 = tpu.dynamic_rotate %1 by %c15_i32 dim 1 : vector<8x256xf32>, i32 -> vector<8x256xf32>
    %c2 = arith.constant 2 : index
    %c0_13 = arith.constant 0 : index
    %c0_14 = arith.constant 0 : index
    %29 = vector.load %arg2[%c2, %c0_13, %c0_14] : memref<9x8x8xf32, #tpu.memory_space<vmem>>, vector<1x8x8xf32>
    %30 = vector.shape_cast %29 : vector<1x8x8xf32> to vector<8x8xf32>
    %31 = vector.broadcast %5 : vector<1x256xf32> to vector<8x256xf32>
    %32 = arith.mulf %28, %31 : vector<8x256xf32>
    %cst_15 = arith.constant dense<0.000000e+00> : vector<8x256xf32>
    %33 = tpu.matmul %30, %32, %cst_15 {dimension_numbers = #tpu.dot_dimension_numbers<[1], [0], [0], [1], [0, 0, 1, 1], [], []>} : vector<8x8xf32>, vector<8x256xf32>, vector<8x256xf32> -> vector<8x256xf32>
    %34 = arith.addf %27, %33 : vector<8x256xf32>
    %c1_i32 = arith.constant 1 : i32
    %35 = tpu.dynamic_rotate %1 by %c1_i32 dim 1 : vector<8x256xf32>, i32 -> vector<8x256xf32>
    %c3 = arith.constant 3 : index
    %c0_16 = arith.constant 0 : index
    %c0_17 = arith.constant 0 : index
    %36 = vector.load %arg2[%c3, %c0_16, %c0_17] : memref<9x8x8xf32, #tpu.memory_space<vmem>>, vector<1x8x8xf32>
    %37 = vector.shape_cast %36 : vector<1x8x8xf32> to vector<8x8xf32>
    %38 = vector.broadcast %6 : vector<1x256xf32> to vector<8x256xf32>
    %39 = arith.mulf %35, %38 : vector<8x256xf32>
    %cst_18 = arith.constant dense<0.000000e+00> : vector<8x256xf32>
    %40 = tpu.matmul %37, %39, %cst_18 {dimension_numbers = #tpu.dot_dimension_numbers<[1], [0], [0], [1], [0, 0, 1, 1], [], []>} : vector<8x8xf32>, vector<8x256xf32>, vector<8x256xf32> -> vector<8x256xf32>
    %41 = arith.addf %34, %40 : vector<8x256xf32>
    %c255_i32 = arith.constant 255 : i32
    %42 = tpu.dynamic_rotate %1 by %c255_i32 dim 1 : vector<8x256xf32>, i32 -> vector<8x256xf32>
    %c5 = arith.constant 5 : index
    %c0_19 = arith.constant 0 : index
    %c0_20 = arith.constant 0 : index
    %43 = vector.load %arg2[%c5, %c0_19, %c0_20] : memref<9x8x8xf32, #tpu.memory_space<vmem>>, vector<1x8x8xf32>
    %44 = vector.shape_cast %43 : vector<1x8x8xf32> to vector<8x8xf32>
    %45 = vector.broadcast %7 : vector<1x256xf32> to vector<8x256xf32>
    %46 = arith.mulf %42, %45 : vector<8x256xf32>
    %cst_21 = arith.constant dense<0.000000e+00> : vector<8x256xf32>
    %47 = tpu.matmul %44, %46, %cst_21 {dimension_numbers = #tpu.dot_dimension_numbers<[1], [0], [0], [1], [0, 0, 1, 1], [], []>} : vector<8x8xf32>, vector<8x256xf32>, vector<8x256xf32> -> vector<8x256xf32>
    %48 = arith.addf %41, %47 : vector<8x256xf32>
    %c241_i32 = arith.constant 241 : i32
    %49 = tpu.dynamic_rotate %1 by %c241_i32 dim 1 : vector<8x256xf32>, i32 -> vector<8x256xf32>
    %c6 = arith.constant 6 : index
    %c0_22 = arith.constant 0 : index
    %c0_23 = arith.constant 0 : index
    %50 = vector.load %arg2[%c6, %c0_22, %c0_23] : memref<9x8x8xf32, #tpu.memory_space<vmem>>, vector<1x8x8xf32>
    %51 = vector.shape_cast %50 : vector<1x8x8xf32> to vector<8x8xf32>
    %52 = vector.broadcast %8 : vector<1x256xf32> to vector<8x256xf32>
    %53 = arith.mulf %49, %52 : vector<8x256xf32>
    %cst_24 = arith.constant dense<0.000000e+00> : vector<8x256xf32>
    %54 = tpu.matmul %51, %53, %cst_24 {dimension_numbers = #tpu.dot_dimension_numbers<[1], [0], [0], [1], [0, 0, 1, 1], [], []>} : vector<8x8xf32>, vector<8x256xf32>, vector<8x256xf32> -> vector<8x256xf32>
    %55 = arith.addf %48, %54 : vector<8x256xf32>
    %c240_i32 = arith.constant 240 : i32
    %56 = tpu.dynamic_rotate %1 by %c240_i32 dim 1 : vector<8x256xf32>, i32 -> vector<8x256xf32>
    %c7 = arith.constant 7 : index
    %c0_25 = arith.constant 0 : index
    %c0_26 = arith.constant 0 : index
    %57 = vector.load %arg2[%c7, %c0_25, %c0_26] : memref<9x8x8xf32, #tpu.memory_space<vmem>>, vector<1x8x8xf32>
    %58 = vector.shape_cast %57 : vector<1x8x8xf32> to vector<8x8xf32>
    %59 = vector.broadcast %9 : vector<1x256xf32> to vector<8x256xf32>
    %60 = arith.mulf %56, %59 : vector<8x256xf32>
    %cst_27 = arith.constant dense<0.000000e+00> : vector<8x256xf32>
    %61 = tpu.matmul %58, %60, %cst_27 {dimension_numbers = #tpu.dot_dimension_numbers<[1], [0], [0], [1], [0, 0, 1, 1], [], []>} : vector<8x8xf32>, vector<8x256xf32>, vector<8x256xf32> -> vector<8x256xf32>
    %62 = arith.addf %55, %61 : vector<8x256xf32>
    %c239_i32 = arith.constant 239 : i32
    %63 = tpu.dynamic_rotate %1 by %c239_i32 dim 1 : vector<8x256xf32>, i32 -> vector<8x256xf32>
    %c8 = arith.constant 8 : index
    %c0_28 = arith.constant 0 : index
    %c0_29 = arith.constant 0 : index
    %64 = vector.load %arg2[%c8, %c0_28, %c0_29] : memref<9x8x8xf32, #tpu.memory_space<vmem>>, vector<1x8x8xf32>
    %65 = vector.shape_cast %64 : vector<1x8x8xf32> to vector<8x8xf32>
    %66 = vector.broadcast %10 : vector<1x256xf32> to vector<8x256xf32>
    %67 = arith.mulf %63, %66 : vector<8x256xf32>
    %cst_30 = arith.constant dense<0.000000e+00> : vector<8x256xf32>
    %68 = tpu.matmul %65, %67, %cst_30 {dimension_numbers = #tpu.dot_dimension_numbers<[1], [0], [0], [1], [0, 0, 1, 1], [], []>} : vector<8x8xf32>, vector<8x256xf32>, vector<8x256xf32> -> vector<8x256xf32>
    %69 = arith.addf %62, %68 : vector<8x256xf32>
    %c0_31 = arith.constant 0 : index
    %c0_32 = arith.constant 0 : index
    %70 = vector.load %arg3[%c0_31, %c0_32] : memref<8x1xf32, #tpu.memory_space<vmem>>, vector<8x1xf32>
    %71 = vector.broadcast %70 : vector<8x1xf32> to vector<8x256xf32>
    %72 = arith.addf %69, %71 : vector<8x256xf32>
    %cst_33 = arith.constant 0.000000e+00 : f32
    %73 = vector.broadcast %cst_33 : f32 to vector<8x256xf32>
    %74 = arith.maximumf %72, %73 : vector<8x256xf32>
    %c4_34 = arith.constant 4 : index
    %c0_35 = arith.constant 0 : index
    %c0_36 = arith.constant 0 : index
    %75 = vector.load %arg4[%c4_34, %c0_35, %c0_36] : memref<9x8x8xf32, #tpu.memory_space<vmem>>, vector<1x8x8xf32>
    %76 = vector.shape_cast %75 : vector<1x8x8xf32> to vector<8x8xf32>
    %cst_37 = arith.constant dense<0.000000e+00> : vector<8x256xf32>
    %77 = tpu.matmul %76, %74, %cst_37 {dimension_numbers = #tpu.dot_dimension_numbers<[1], [0], [0], [1], [0, 0, 1, 1], [], []>} : vector<8x8xf32>, vector<8x256xf32>, vector<8x256xf32> -> vector<8x256xf32>
    %c17_i32_38 = arith.constant 17 : i32
    %78 = tpu.dynamic_rotate %74 by %c17_i32_38 dim 1 : vector<8x256xf32>, i32 -> vector<8x256xf32>
    %c0_39 = arith.constant 0 : index
    %c0_40 = arith.constant 0 : index
    %c0_41 = arith.constant 0 : index
    %79 = vector.load %arg4[%c0_39, %c0_40, %c0_41] : memref<9x8x8xf32, #tpu.memory_space<vmem>>, vector<1x8x8xf32>
    %80 = vector.shape_cast %79 : vector<1x8x8xf32> to vector<8x8xf32>
    %81 = vector.broadcast %3 : vector<1x256xf32> to vector<8x256xf32>
    %82 = arith.mulf %78, %81 : vector<8x256xf32>
    %cst_42 = arith.constant dense<0.000000e+00> : vector<8x256xf32>
    %83 = tpu.matmul %80, %82, %cst_42 {dimension_numbers = #tpu.dot_dimension_numbers<[1], [0], [0], [1], [0, 0, 1, 1], [], []>} : vector<8x8xf32>, vector<8x256xf32>, vector<8x256xf32> -> vector<8x256xf32>
    %84 = arith.addf %77, %83 : vector<8x256xf32>
    %c16_i32_43 = arith.constant 16 : i32
    %85 = tpu.dynamic_rotate %74 by %c16_i32_43 dim 1 : vector<8x256xf32>, i32 -> vector<8x256xf32>
    %c1_44 = arith.constant 1 : index
    %c0_45 = arith.constant 0 : index
    %c0_46 = arith.constant 0 : index
    %86 = vector.load %arg4[%c1_44, %c0_45, %c0_46] : memref<9x8x8xf32, #tpu.memory_space<vmem>>, vector<1x8x8xf32>
    %87 = vector.shape_cast %86 : vector<1x8x8xf32> to vector<8x8xf32>
    %88 = vector.broadcast %4 : vector<1x256xf32> to vector<8x256xf32>
    %89 = arith.mulf %85, %88 : vector<8x256xf32>
    %cst_47 = arith.constant dense<0.000000e+00> : vector<8x256xf32>
    %90 = tpu.matmul %87, %89, %cst_47 {dimension_numbers = #tpu.dot_dimension_numbers<[1], [0], [0], [1], [0, 0, 1, 1], [], []>} : vector<8x8xf32>, vector<8x256xf32>, vector<8x256xf32> -> vector<8x256xf32>
    %91 = arith.addf %84, %90 : vector<8x256xf32>
    %c15_i32_48 = arith.constant 15 : i32
    %92 = tpu.dynamic_rotate %74 by %c15_i32_48 dim 1 : vector<8x256xf32>, i32 -> vector<8x256xf32>
    %c2_49 = arith.constant 2 : index
    %c0_50 = arith.constant 0 : index
    %c0_51 = arith.constant 0 : index
    %93 = vector.load %arg4[%c2_49, %c0_50, %c0_51] : memref<9x8x8xf32, #tpu.memory_space<vmem>>, vector<1x8x8xf32>
    %94 = vector.shape_cast %93 : vector<1x8x8xf32> to vector<8x8xf32>
    %95 = vector.broadcast %5 : vector<1x256xf32> to vector<8x256xf32>
    %96 = arith.mulf %92, %95 : vector<8x256xf32>
    %cst_52 = arith.constant dense<0.000000e+00> : vector<8x256xf32>
    %97 = tpu.matmul %94, %96, %cst_52 {dimension_numbers = #tpu.dot_dimension_numbers<[1], [0], [0], [1], [0, 0, 1, 1], [], []>} : vector<8x8xf32>, vector<8x256xf32>, vector<8x256xf32> -> vector<8x256xf32>
    %98 = arith.addf %91, %97 : vector<8x256xf32>
    %c1_i32_53 = arith.constant 1 : i32
    %99 = tpu.dynamic_rotate %74 by %c1_i32_53 dim 1 : vector<8x256xf32>, i32 -> vector<8x256xf32>
    %c3_54 = arith.constant 3 : index
    %c0_55 = arith.constant 0 : index
    %c0_56 = arith.constant 0 : index
    %100 = vector.load %arg4[%c3_54, %c0_55, %c0_56] : memref<9x8x8xf32, #tpu.memory_space<vmem>>, vector<1x8x8xf32>
    %101 = vector.shape_cast %100 : vector<1x8x8xf32> to vector<8x8xf32>
    %102 = vector.broadcast %6 : vector<1x256xf32> to vector<8x256xf32>
    %103 = arith.mulf %99, %102 : vector<8x256xf32>
    %cst_57 = arith.constant dense<0.000000e+00> : vector<8x256xf32>
    %104 = tpu.matmul %101, %103, %cst_57 {dimension_numbers = #tpu.dot_dimension_numbers<[1], [0], [0], [1], [0, 0, 1, 1], [], []>} : vector<8x8xf32>, vector<8x256xf32>, vector<8x256xf32> -> vector<8x256xf32>
    %105 = arith.addf %98, %104 : vector<8x256xf32>
    %c255_i32_58 = arith.constant 255 : i32
    %106 = tpu.dynamic_rotate %74 by %c255_i32_58 dim 1 : vector<8x256xf32>, i32 -> vector<8x256xf32>
    %c5_59 = arith.constant 5 : index
    %c0_60 = arith.constant 0 : index
    %c0_61 = arith.constant 0 : index
    %107 = vector.load %arg4[%c5_59, %c0_60, %c0_61] : memref<9x8x8xf32, #tpu.memory_space<vmem>>, vector<1x8x8xf32>
    %108 = vector.shape_cast %107 : vector<1x8x8xf32> to vector<8x8xf32>
    %109 = vector.broadcast %7 : vector<1x256xf32> to vector<8x256xf32>
    %110 = arith.mulf %106, %109 : vector<8x256xf32>
    %cst_62 = arith.constant dense<0.000000e+00> : vector<8x256xf32>
    %111 = tpu.matmul %108, %110, %cst_62 {dimension_numbers = #tpu.dot_dimension_numbers<[1], [0], [0], [1], [0, 0, 1, 1], [], []>} : vector<8x8xf32>, vector<8x256xf32>, vector<8x256xf32> -> vector<8x256xf32>
    %112 = arith.addf %105, %111 : vector<8x256xf32>
    %c241_i32_63 = arith.constant 241 : i32
    %113 = tpu.dynamic_rotate %74 by %c241_i32_63 dim 1 : vector<8x256xf32>, i32 -> vector<8x256xf32>
    %c6_64 = arith.constant 6 : index
    %c0_65 = arith.constant 0 : index
    %c0_66 = arith.constant 0 : index
    %114 = vector.load %arg4[%c6_64, %c0_65, %c0_66] : memref<9x8x8xf32, #tpu.memory_space<vmem>>, vector<1x8x8xf32>
    %115 = vector.shape_cast %114 : vector<1x8x8xf32> to vector<8x8xf32>
    %116 = vector.broadcast %8 : vector<1x256xf32> to vector<8x256xf32>
    %117 = arith.mulf %113, %116 : vector<8x256xf32>
    %cst_67 = arith.constant dense<0.000000e+00> : vector<8x256xf32>
    %118 = tpu.matmul %115, %117, %cst_67 {dimension_numbers = #tpu.dot_dimension_numbers<[1], [0], [0], [1], [0, 0, 1, 1], [], []>} : vector<8x8xf32>, vector<8x256xf32>, vector<8x256xf32> -> vector<8x256xf32>
    %119 = arith.addf %112, %118 : vector<8x256xf32>
    %c240_i32_68 = arith.constant 240 : i32
    %120 = tpu.dynamic_rotate %74 by %c240_i32_68 dim 1 : vector<8x256xf32>, i32 -> vector<8x256xf32>
    %c7_69 = arith.constant 7 : index
    %c0_70 = arith.constant 0 : index
    %c0_71 = arith.constant 0 : index
    %121 = vector.load %arg4[%c7_69, %c0_70, %c0_71] : memref<9x8x8xf32, #tpu.memory_space<vmem>>, vector<1x8x8xf32>
    %122 = vector.shape_cast %121 : vector<1x8x8xf32> to vector<8x8xf32>
    %123 = vector.broadcast %9 : vector<1x256xf32> to vector<8x256xf32>
    %124 = arith.mulf %120, %123 : vector<8x256xf32>
    %cst_72 = arith.constant dense<0.000000e+00> : vector<8x256xf32>
    %125 = tpu.matmul %122, %124, %cst_72 {dimension_numbers = #tpu.dot_dimension_numbers<[1], [0], [0], [1], [0, 0, 1, 1], [], []>} : vector<8x8xf32>, vector<8x256xf32>, vector<8x256xf32> -> vector<8x256xf32>
    %126 = arith.addf %119, %125 : vector<8x256xf32>
    %c239_i32_73 = arith.constant 239 : i32
    %127 = tpu.dynamic_rotate %74 by %c239_i32_73 dim 1 : vector<8x256xf32>, i32 -> vector<8x256xf32>
    %c8_74 = arith.constant 8 : index
    %c0_75 = arith.constant 0 : index
    %c0_76 = arith.constant 0 : index
    %128 = vector.load %arg4[%c8_74, %c0_75, %c0_76] : memref<9x8x8xf32, #tpu.memory_space<vmem>>, vector<1x8x8xf32>
    %129 = vector.shape_cast %128 : vector<1x8x8xf32> to vector<8x8xf32>
    %130 = vector.broadcast %10 : vector<1x256xf32> to vector<8x256xf32>
    %131 = arith.mulf %127, %130 : vector<8x256xf32>
    %cst_77 = arith.constant dense<0.000000e+00> : vector<8x256xf32>
    %132 = tpu.matmul %129, %131, %cst_77 {dimension_numbers = #tpu.dot_dimension_numbers<[1], [0], [0], [1], [0, 0, 1, 1], [], []>} : vector<8x8xf32>, vector<8x256xf32>, vector<8x256xf32> -> vector<8x256xf32>
    %133 = arith.addf %126, %132 : vector<8x256xf32>
    %c0_78 = arith.constant 0 : index
    %c0_79 = arith.constant 0 : index
    %134 = vector.load %arg5[%c0_78, %c0_79] : memref<8x1xf32, #tpu.memory_space<vmem>>, vector<8x1xf32>
    %135 = vector.broadcast %134 : vector<8x1xf32> to vector<8x256xf32>
    %136 = arith.addf %133, %135 : vector<8x256xf32>
    %cst_80 = arith.constant 0.000000e+00 : f32
    %137 = vector.broadcast %cst_80 : f32 to vector<8x256xf32>
    %138 = arith.maximumf %136, %137 : vector<8x256xf32>
    %cst_81 = arith.constant dense<0.000000e+00> : vector<8xf32>
    %139 = vector.multi_reduction <add>, %138, %cst_81 [1] : vector<8x256xf32> to vector<8xf32>
    %140 = vector.shape_cast %139 : vector<8xf32> to vector<8x1xf32>
    %cst_82 = arith.constant 3.906250e-03 : f32
    %141 = vector.broadcast %cst_82 : f32 to vector<8x1xf32>
    %142 = arith.mulf %140, %141 : vector<8x1xf32>
    %c0_83 = arith.constant 0 : index
    %c0_84 = arith.constant 0 : index
    %143 = vector.load %arg6[%c0_83, %c0_84] : memref<8x8xf32, #tpu.memory_space<vmem>>, vector<8x8xf32>
    %cst_85 = arith.constant dense<0.000000e+00> : vector<8x1xf32>
    %144 = tpu.matmul %143, %142, %cst_85 {dimension_numbers = #tpu.dot_dimension_numbers<[1], [0], [0], [1], [0, 0, 1, 1], [], []>} : vector<8x8xf32>, vector<8x1xf32>, vector<8x1xf32> -> vector<8x1xf32>
    %cst_86 = arith.constant 0.000000e+00 : f32
    %145 = vector.broadcast %cst_86 : f32 to vector<8x1xf32>
    %146 = arith.maximumf %144, %145 : vector<8x1xf32>
    %c0_87 = arith.constant 0 : index
    %c0_88 = arith.constant 0 : index
    %147 = vector.load %arg7[%c0_87, %c0_88] : memref<8x8xf32, #tpu.memory_space<vmem>>, vector<8x8xf32>
    %cst_89 = arith.constant dense<0.000000e+00> : vector<8x1xf32>
    %148 = tpu.matmul %147, %146, %cst_89 {dimension_numbers = #tpu.dot_dimension_numbers<[1], [0], [0], [1], [0, 0, 1, 1], [], []>} : vector<8x8xf32>, vector<8x1xf32>, vector<8x1xf32> -> vector<8x1xf32>
    %149 = arith.negf %148 : vector<8x1xf32>
    %150 = math.exp %149 : vector<8x1xf32>
    %cst_90 = arith.constant 1.000000e+00 : f32
    %151 = vector.broadcast %cst_90 : f32 to vector<8x1xf32>
    %152 = arith.addf %151, %150 : vector<8x1xf32>
    %153 = arith.divf %151, %152 : vector<8x1xf32>
    %154 = vector.broadcast %153 : vector<8x1xf32> to vector<8x256xf32>
    %155 = arith.mulf %138, %154 : vector<8x256xf32>
    %156 = arith.addf %1, %155 : vector<8x256xf32>
    %c0_91 = arith.constant 0 : index
    %c0_92 = arith.constant 0 : index
    %c0_93 = arith.constant 0 : index
    %157 = vector.load %arg9[%c0_91, %c0_92, %c0_93] : memref<1x8x256xf32, #tpu.memory_space<vmem>>, vector<1x8x256xf32>
    %158 = vector.shape_cast %157 : vector<1x8x256xf32> to vector<8x256xf32>
    %159 = vector.shape_cast %156 : vector<8x256xf32> to vector<1x8x256xf32>
    tpu.vector_store %arg9[%c0_91, %c0_92, %c0_93], %159 {strides = array<i32>} : memref<1x8x256xf32, #tpu.memory_space<vmem>>, vector<1x8x256xf32>,
    return
  }
  func.func @transform_0(%arg0: i32) -> (i32, i32, i32) {
    %c0_i32 = arith.constant 0 : i32
    %c0_i32_0 = arith.constant 0 : i32
    %c0_i32_1 = arith.constant 0 : i32
    return %arg0, %c0_i32, %c0_i32_0 : i32, i32, i32
  }
  func.func @transform_1(%arg0: i32) -> (i32, i32, i32) {
    %c0_i32 = arith.constant 0 : i32
    %c0_i32_0 = arith.constant 0 : i32
    %c0_i32_1 = arith.constant 0 : i32
    %c0_i32_2 = arith.constant 0 : i32
    return %c0_i32, %c0_i32_0, %c0_i32_1 : i32, i32, i32
  }
  func.func @transform_2(%arg0: i32) -> (i32, i32) {
    %c0_i32 = arith.constant 0 : i32
    %c0_i32_0 = arith.constant 0 : i32
    %c0_i32_1 = arith.constant 0 : i32
    return %c0_i32, %c0_i32_0 : i32, i32
  }
  func.func @transform_3(%arg0: i32) -> (i32, i32, i32) {
    %c0_i32 = arith.constant 0 : i32
    %c0_i32_0 = arith.constant 0 : i32
    %c0_i32_1 = arith.constant 0 : i32
    %c0_i32_2 = arith.constant 0 : i32
    return %c0_i32, %c0_i32_0, %c0_i32_1 : i32, i32, i32
  }
  func.func @transform_4(%arg0: i32) -> (i32, i32) {
    %c0_i32 = arith.constant 0 : i32
    %c0_i32_0 = arith.constant 0 : i32
    %c0_i32_1 = arith.constant 0 : i32
    return %c0_i32, %c0_i32_0 : i32, i32
  }
  func.func @transform_5(%arg0: i32) -> (i32, i32) {
    %c0_i32 = arith.constant 0 : i32
    %c0_i32_0 = arith.constant 0 : i32
    %c0_i32_1 = arith.constant 0 : i32
    return %c0_i32, %c0_i32_0 : i32, i32
  }
  func.func @transform_6(%arg0: i32) -> (i32, i32) {
    %c0_i32 = arith.constant 0 : i32
    %c0_i32_0 = arith.constant 0 : i32
    %c0_i32_1 = arith.constant 0 : i32
    return %c0_i32, %c0_i32_0 : i32, i32
  }
  func.func @transform_7(%arg0: i32) -> (i32, i32) {
    %c0_i32 = arith.constant 0 : i32
    %c0_i32_0 = arith.constant 0 : i32
    %c0_i32_1 = arith.constant 0 : i32
    return %c0_i32, %c0_i32_0 : i32, i32
  }
  func.func @transform_8(%arg0: i32) -> (i32, i32, i32) {
    %c0_i32 = arith.constant 0 : i32
    %c0_i32_0 = arith.constant 0 : i32
    %c0_i32_1 = arith.constant 0 : i32
    return %arg0, %c0_i32, %c0_i32_0 : i32, i32, i32
  }
}

</mosaic_0001>

<llo_original>
// kernel: tpu_custom_call.1
$region0: #{tpu_custom_call.1}
  #allocation0 [shape = 'u32[]', space=smem, size = 0x4, offset = 0x4, fixed_abs, tag = 'smem constant byte address 0x4 - core index']
  #allocation1 [shape = 'u32[144,128]{1,0:T(1,128)}', space=vmem, size = 0x12000, scoped, tag = 'internal scratch']
  %s0 = inlined_call_operand.vmem [shape: f32[1,8,256], index: 0, kind: input, shape index: {}]
  %s1 = inlined_call_operand.vmem [shape: f32[9,8,8], index: 1, kind: input, shape index: {}]
  %s2 = inlined_call_operand.vmem [shape: f32[8,1], index: 2, kind: input, shape index: {}]
  %s3 = inlined_call_operand.vmem [shape: f32[9,8,8], index: 3, kind: input, shape index: {}]
  %s4 = inlined_call_operand.vmem [shape: f32[8,1], index: 4, kind: input, shape index: {}]
  %s5 = inlined_call_operand.vmem [shape: f32[8,8], index: 5, kind: input, shape index: {}]
  %s6 = inlined_call_operand.vmem [shape: f32[8,8], index: 6, kind: input, shape index: {}]
  %s7 = inlined_call_operand.vmem [shape: f32[9,256], index: 7, kind: input, shape index: {}]
  %s8 = inlined_call_operand.hbm [shape: f32[1,8,256], index: 8, kind: output, shape index: {}]
  %s9 = sld [smem:[#allocation0]]
  $region42: #{tpu_custom_call.1} parent=0
    _
  %s11 = ssub.s32 1, %s9
  %s12 = scalar_select 0, %s11, %s9
  $region1: #{tpu_custom_call.1} parent=0
    #allocation2 [shape = 'u8[8192]{0}', space=vmem, size = 0x2000, scoped, tag = 'output window, operand 0, single buffered']
    #allocation3 [shape = 's32[1]{0}', space=sflag, size = 0x4, scoped, tag = 'scoped memory for tpu_custom_call.1']
    %13 = vsyncpa [#allocation3], 0
    // Predicated region
    $region2: #{tpu_custom_call.1} parent=1 // pred_check
      _
    $region3: #{tpu_custom_call.1} parent=1 // pred_check_branch
      %15 = sbr.rel (0) target = $region5
    $region4: #{tpu_custom_call.1} parent=1 // pred_region
      _
    $region5: #{tpu_custom_call.1} parent=1 // pred_fallthru
      _
    // Predicated region
    $region6: #{tpu_custom_call.1} parent=1 // pred_check
      _
    $region7: #{tpu_custom_call.1} parent=1 // pred_check_branch
      %17 = sbr.rel (0) target = $region9
    $region8: #{tpu_custom_call.1} parent=1 // pred_region
      _
    $region9: #{tpu_custom_call.1} parent=1 // pred_fallthru
      _
    // Predicated region
    $region10: #{tpu_custom_call.1} parent=1 // pred_check
      _
    $region11: #{tpu_custom_call.1} parent=1 // pred_check_branch
      %19 = sbr.rel (0) target = $region13
    $region12: #{tpu_custom_call.1} parent=1 // pred_region
      _
    $region13: #{tpu_custom_call.1} parent=1 // pred_fallthru
      _
    // Predicated region
    $region14: #{tpu_custom_call.1} parent=1 // pred_check
      _
    $region15: #{tpu_custom_call.1} parent=1 // pred_check_branch
      %21 = sbr.rel (0) target = $region17
    $region16: #{tpu_custom_call.1} parent=1 // pred_region
      _
    $region17: #{tpu_custom_call.1} parent=1 // pred_fallthru
      _
    // Predicated region
    $region18: #{tpu_custom_call.1} parent=1 // pred_check
      _
    $region19: #{tpu_custom_call.1} parent=1 // pred_check_branch
      %23 = sbr.rel (0) target = $region21
    $region20: #{tpu_custom_call.1} parent=1 // pred_region
      _
    $region21: #{tpu_custom_call.1} parent=1 // pred_fallthru
      _
    // Predicated region
    $region22: #{tpu_custom_call.1} parent=1 // pred_check
      _
    $region23: #{tpu_custom_call.1} parent=1 // pred_check_branch
      %25 = sbr.rel (0) target = $region25
    $region24: #{tpu_custom_call.1} parent=1 // pred_region
      _
    $region25: #{tpu_custom_call.1} parent=1 // pred_fallthru
      _
    // Predicated region
    $region26: #{tpu_custom_call.1} parent=1 // pred_check
      _
    $region27: #{tpu_custom_call.1} parent=1 // pred_check_branch
      %27 = sbr.rel (0) target = $region29
    $region28: #{tpu_custom_call.1} parent=1 // pred_region
      _
    $region29: #{tpu_custom_call.1} parent=1 // pred_fallthru
      _
    // Predicated region
    $region30: #{tpu_custom_call.1} parent=1 // pred_check
      _
    $region31: #{tpu_custom_call.1} parent=1 // pred_check_branch
      %29 = sbr.rel (0) target = $region33
    $region32: #{tpu_custom_call.1} parent=1 // pred_region
      _
    $region33: #{tpu_custom_call.1} parent=1 // pred_fallthru
      _
    %v30 = vld [vmem:[%s0] sm:$0xff]
    %v31 = vld [vmem:[%s0 + $0x8] sm:$0xff]
    %v32 = vld [vmem:[%s7] sm:$0xff]
    %v33 = vld [vmem:[%s7 + $0x8] sm:$0xff]
    %v34 = vld [vmem:[%s7 + $0x10] sm:$0x1]
    %v35 = vld [vmem:[%s7 + $0x18] sm:$0x1]
    %s36 = scalar_lea.vmem %s1, 32
    %v37 = vld [vmem:[%s36] sm:$0xff]
    %38 = vrot.lane.b32.xlu0 %v30, 17
    %v39 = vpop.permute.xlu0 %38
    %40 = vrot.lane.b32.xlu0 %v31, 17
    %v41 = vpop.permute.xlu0 %40
    %v42 = vlaneseq
    %v43 = vand.u32 %v42, 127
    %vm44 = vcmp.lt.s32.totalorder %v43, 17
    %v45 = vsel %vm44, %v39, %v41
    %v46 = vsel %vm44, %v41, %v39
    %v47 = vld [vmem:[%s1] sm:$0xff]
    %v48 = vlaneseq
    %v49 = vshrl.u32 %v48, 7
    %v50 = vsub.s32 0, %v49
    %v51 = vrot.slane %v32, %v50
    %v52 = vlaneseq
    %v53 = vshrl.u32 %v52, 7
    %v54 = vsub.s32 0, %v53
    %v55 = vrot.slane %v33, %v54
    %v56 = vmul.f32 %v46, %v51
    %v57 = vmul.f32 %v45, %v55
    %vm58 = vcmask 64512
    %v60 = vsel %vm58, %v47, 0
    %62 = vmatprep.subr.mxu0 %v57
    %63 = vmatpush1.msra.mxu0 %v56
    %64 = vmatprep.subr.mxu0 0.0
    %65 = vmatpush1.msra.mxu0 0.0
    %66 = vmatprep.subr.mxu0 0.0
    %67 = vmatpush1.msra.mxu0 0.0
    %68 = vmatprep.subr.mxu0 0.0
    %69 = vmatpush1.msra.mxu0 0.0
    %70 = vmatprep.subr.mxu0 0.0
    %71 = vmatpush1.msra.mxu0 0.0
    %72 = vmatprep.subr.mxu0 0.0
    %73 = vmatpush1.msra.mxu0 0.0
    %74 = vmatprep.subr.mxu0 0.0
    %75 = vmatpush1.msra.mxu0 0.0
    %76 = vmatprep.subr.mxu0 0.0
    %77 = vmatpush1.msra.mxu0 0.0
    %78 = vmatprep.subr.mxu0 0.0
    %79 = vmatpush1.msra.mxu0 0.0
    %80 = vmatprep.subr.mxu0 0.0
    %81 = vmatpush1.msra.mxu0 0.0
    %82 = vmatprep.subr.mxu0 0.0
    %83 = vmatpush1.msra.mxu0 0.0
    %84 = vmatprep.subr.mxu0 0.0
    %85 = vmatpush1.msra.mxu0 0.0
    %86 = vmatprep.subr.mxu0 0.0
    %87 = vmatpush1.msra.mxu0 0.0
    %88 = vmatprep.subr.mxu0 0.0
    %89 = vmatpush1.msra.mxu0 0.0
    %90 = vmatprep.subr.mxu0 0.0
    %91 = vmatpush1.msra.mxu0 0.0
    %92 = vmatprep.subr.mxu0 0.0
    %93 = vmatpush1.msra.mxu0 0.0
    %94 = vmatprep.subr.mxu0 0.0
    %95 = vmatpush1.msra.mxu0 0.0
    %96 = vmatprep.subr.mxu0 0.0
    %97 = vmatpush1.msra.mxu0 0.0
    %98 = vmatprep.subr.mxu0 0.0
    %99 = vmatpush1.msra.mxu0 0.0
    %100 = vmatprep.subr.mxu0 0.0
    %101 = vmatpush1.msra.mxu0 0.0
    %102 = vmatprep.subr.mxu0 0.0
    %103 = vmatpush1.msra.mxu0 0.0
    %104 = vmatprep.subr.mxu0 0.0
    %105 = vmatpush1.msra.mxu0 0.0
    %106 = vmatprep.subr.mxu0 0.0
    %107 = vmatpush1.msra.mxu0 0.0
    %108 = vmatprep.subr.mxu0 0.0
    %109 = vmatpush1.msra.mxu0 0.0
    %110 = vmatprep.subr.mxu0 0.0
    %111 = vmatpush1.msra.mxu0 0.0
    %112 = vmatprep.subr.mxu0 0.0
    %113 = vmatpush1.msra.mxu0 0.0
    %114 = vmatprep.subr.mxu0 0.0
    %115 = vmatpush1.msra.mxu0 0.0
    %116 = vmatprep.subr.mxu0 0.0
    %117 = vmatpush1.msra.mxu0 0.0
    %118 = vmatprep.subr.mxu0 0.0
    %119 = vmatpush1.msra.mxu0 0.0
    %120 = vmatprep.subr.mxu0 0.0
    %121 = vmatpush1.msra.mxu0 0.0
    %122 = vmatprep.subr.mxu0 0.0
    %123 = vmatpush1.msra.mxu0 0.0
    %124 = vmatprep.subr.mxu0 0.0
    %125 = vmatpush1.msra.mxu0 0.0
    %126 = vmatprep.mubr.f32.mxu0 0.0
    %127 = vmatmul.mubr.f32.gmra.mrb[0].mxu0 %v60
    %v128 = vpop.f32.mrb[0].mxu0
    %v129 = vadd.f32 0.0, %v128
    %v130 = vpop.f32.mrb[0].mxu0
    %v131 = vadd.f32 0.0, %v130
    %132 = vdwg.mxu0
    %v134 = vsel %vm58, %v37, 0
    %136 = vmatprep.subr.mxu0 %v31
    %137 = vmatpush1.msra.mxu0 %v30
    %138 = vmatprep.subr.mxu0 0.0
    %139 = vmatpush1.msra.mxu0 0.0
    %140 = vmatprep.subr.mxu0 0.0
    %141 = vmatpush1.msra.mxu0 0.0
    %142 = vmatprep.subr.mxu0 0.0
    %143 = vmatpush1.msra.mxu0 0.0
    %144 = vmatprep.subr.mxu0 0.0
    %145 = vmatpush1.msra.mxu0 0.0
    %146 = vmatprep.subr.mxu0 0.0
    %147 = vmatpush1.msra.mxu0 0.0
    %148 = vmatprep.subr.mxu0 0.0
    %149 = vmatpush1.msra.mxu0 0.0
    %150 = vmatprep.subr.mxu0 0.0
    %151 = vmatpush1.msra.mxu0 0.0
    %152 = vmatprep.subr.mxu0 0.0
    %153 = vmatpush1.msra.mxu0 0.0
    %154 = vmatprep.subr.mxu0 0.0
    %155 = vmatpush1.msra.mxu0 0.0
    %156 = vmatprep.subr.mxu0 0.0
    %157 = vmatpush1.msra.mxu0 0.0
    %158 = vmatprep.subr.mxu0 0.0
    %159 = vmatpush1.msra.mxu0 0.0
    %160 = vmatprep.subr.mxu0 0.0
    %161 = vmatpush1.msra.mxu0 0.0
    %162 = vmatprep.subr.mxu0 0.0
    %163 = vmatpush1.msra.mxu0 0.0
    %164 = vmatprep.subr.mxu0 0.0
    %165 = vmatpush1.msra.mxu0 0.0
    %166 = vmatprep.subr.mxu0 0.0
    %167 = vmatpush1.msra.mxu0 0.0
    %168 = vmatprep.subr.mxu0 0.0
    %169 = vmatpush1.msra.mxu0 0.0
    %170 = vmatprep.subr.mxu0 0.0
    %171 = vmatpush1.msra.mxu0 0.0
    %172 = vmatprep.subr.mxu0 0.0
    %173 = vmatpush1.msra.mxu0 0.0
    %174 = vmatprep.subr.mxu0 0.0
    %175 = vmatpush1.msra.mxu0 0.0
    %176 = vmatprep.subr.mxu0 0.0
    %177 = vmatpush1.msra.mxu0 0.0
    %178 = vmatprep.subr.mxu0 0.0
    %179 = vmatpush1.msra.mxu0 0.0
    %180 = vmatprep.subr.mxu0 0.0
    %181 = vmatpush1.msra.mxu0 0.0
    %182 = vmatprep.subr.mxu0 0.0
    %183 = vmatpush1.msra.mxu0 0.0
    %184 = vmatprep.subr.mxu0 0.0
    %185 = vmatpush1.msra.mxu0 0.0
    %186 = vmatprep.subr.mxu0 0.0
    %187 = vmatpush1.msra.mxu0 0.0
    %188 = vmatprep.subr.mxu0 0.0
    %189 = vmatpush1.msra.mxu0 0.0
    %190 = vmatprep.subr.mxu0 0.0
    %191 = vmatpush1.msra.mxu0 0.0
    %192 = vmatprep.subr.mxu0 0.0
    %193 = vmatpush1.msra.mxu0 0.0
    %194 = vmatprep.subr.mxu0 0.0
    %195 = vmatpush1.msra.mxu0 0.0
    %196 = vmatprep.subr.mxu0 0.0
    %197 = vmatpush1.msra.mxu0 0.0
    %198 = vmatprep.subr.mxu0 0.0
    %199 = vmatpush1.msra.mxu0 0.0
    %200 = vmatprep.mubr.f32.mxu0 0.0
    %201 = vmatmul.mubr.f32.gmra.mrb[0].mxu0 %v134
    %v202 = vpop.f32.mrb[0].mxu0
    %v203 = vadd.f32 %v129, %v202
    %v204 = vpop.f32.mrb[0].mxu0
    %v205 = vadd.f32 %v131, %v204
    %206 = vdwg.mxu0
    %207 = vrot.lane.b32.xlu0 %v30, 16
    %v208 = vpop.permute.xlu0 %207
    %209 = vrot.lane.b32.xlu0 %v31, 16
    %v210 = vpop.permute.xlu0 %209
    %vm211 = vcmp.lt.s32.totalorder %v43, 16
    %v212 = vsel %vm211, %v208, %v210
    %v213 = vsel %vm211, %v210, %v208
    %s214 = scalar_lea.vmem %s1, 8
    %v215 = vld [vmem:[%s214] sm:$0xff]
    %v216 = vlaneseq
    %v217 = vshrl.u32 %v216, 7
    %v218 = vsub.s32 1, %v217
    %v219 = vrot.slane %v32, %v218
    %v220 = vlaneseq
    %v221 = vshrl.u32 %v220, 7
    %v222 = vsub.s32 1, %v221
    %v223 = vrot.slane %v33, %v222
    %v224 = vmul.f32 %v213, %v219
    %v225 = vmul.f32 %v212, %v223
    %v227 = vsel %vm58, %v215, 0
    %229 = vmatprep.subr.mxu0 %v225
    %230 = vmatpush1.msra.mxu0 %v224
    %231 = vmatprep.subr.mxu0 0.0
    %232 = vmatpush1.msra.mxu0 0.0
    %233 = vmatprep.subr.mxu0 0.0
    %234 = vmatpush1.msra.mxu0 0.0
    %235 = vmatprep.subr.mxu0 0.0
    %236 = vmatpush1.msra.mxu0 0.0
    %237 = vmatprep.subr.mxu0 0.0
    %238 = vmatpush1.msra.mxu0 0.0
    %239 = vmatprep.subr.mxu0 0.0
    %240 = vmatpush1.msra.mxu0 0.0
    %241 = vmatprep.subr.mxu0 0.0
    %242 = vmatpush1.msra.mxu0 0.0
    %243 = vmatprep.subr.mxu0 0.0
    %244 = vmatpush1.msra.mxu0 0.0
    %245 = vmatprep.subr.mxu0 0.0
    %246 = vmatpush1.msra.mxu0 0.0
    %247 = vmatprep.subr.mxu0 0.0
    %248 = vmatpush1.msra.mxu0 0.0
    %249 = vmatprep.subr.mxu0 0.0
    %250 = vmatpush1.msra.mxu0 0.0
    %251 = vmatprep.subr.mxu0 0.0
    %252 = vmatpush1.msra.mxu0 0.0
    %253 = vmatprep.subr.mxu0 0.0
    %254 = vmatpush1.msra.mxu0 0.0
    %255 = vmatprep.subr.mxu0 0.0
    %256 = vmatpush1.msra.mxu0 0.0
    %257 = vmatprep.subr.mxu0 0.0
    %258 = vmatpush1.msra.mxu0 0.0
    %259 = vmatprep.subr.mxu0 0.0
    %260 = vmatpush1.msra.mxu0 0.0
    %261 = vmatprep.subr.mxu0 0.0
    %262 = vmatpush1.msra.mxu0 0.0
    %263 = vmatprep.subr.mxu0 0.0
    %264 = vmatpush1.msra.mxu0 0.0
    %265 = vmatprep.subr.mxu0 0.0
    %266 = vmatpush1.msra.mxu0 0.0
    %267 = vmatprep.subr.mxu0 0.0
    %268 = vmatpush1.msra.mxu0 0.0
    %269 = vmatprep.subr.mxu0 0.0
    %270 = vmatpush1.msra.mxu0 0.0
    %271 = vmatprep.subr.mxu0 0.0
    %272 = vmatpush1.msra.mxu0 0.0
    %273 = vmatprep.subr.mxu0 0.0
    %274 = vmatpush1.msra.mxu0 0.0
    %275 = vmatprep.subr.mxu0 0.0
    %276 = vmatpush1.msra.mxu0 0.0
    %277 = vmatprep.subr.mxu0 0.0
    %278 = vmatpush1.msra.mxu0 0.0
    %279 = vmatprep.subr.mxu0 0.0
    %280 = vmatpush1.msra.mxu0 0.0
    %281 = vmatprep.subr.mxu0 0.0
    %282 = vmatpush1.msra.mxu0 0.0
    %283 = vmatprep.subr.mxu0 0.0
    %284 = vmatpush1.msra.mxu0 0.0
    %285 = vmatprep.subr.mxu0 0.0
    %286 = vmatpush1.msra.mxu0 0.0
    %287 = vmatprep.subr.mxu0 0.0
    %288 = vmatpush1.msra.mxu0 0.0
    %289 = vmatprep.subr.mxu0 0.0
    %290 = vmatpush1.msra.mxu0 0.0
    %291 = vmatprep.subr.mxu0 0.0
    %292 = vmatpush1.msra.mxu0 0.0
    %293 = vmatprep.mubr.f32.mxu0 0.0
    %294 = vmatmul.mubr.f32.gmra.mrb[0].mxu0 %v227
    %v295 = vpop.f32.mrb[0].mxu0
    %v296 = vadd.f32 0.0, %v295
    %v297 = vpop.f32.mrb[0].mxu0
    %v298 = vadd.f32 0.0, %v297
    %299 = vdwg.mxu0
    %v300 = vadd.f32 %v203, %v296
    %v301 = vadd.f32 %v205, %v298
    %302 = vrot.lane.b32.xlu0 %v30, 15
    %v303 = vpop.permute.xlu0 %302
    %304 = vrot.lane.b32.xlu0 %v31, 15
    %v305 = vpop.permute.xlu0 %304
    %vm306 = vcmp.lt.s32.totalorder %v43, 15
    %v307 = vsel %vm306, %v303, %v305
    %v308 = vsel %vm306, %v305, %v303
    %s309 = scalar_lea.vmem %s1, 16
    %v310 = vld [vmem:[%s309] sm:$0xff]
    %v311 = vlaneseq
    %v312 = vshrl.u32 %v311, 7
    %v313 = vsub.s32 2, %v312
    %v314 = vrot.slane %v32, %v313
    %v315 = vlaneseq
    %v316 = vshrl.u32 %v315, 7
    %v317 = vsub.s32 2, %v316
    %v318 = vrot.slane %v33, %v317
    %v319 = vmul.f32 %v308, %v314
    %v320 = vmul.f32 %v307, %v318
    %v322 = vsel %vm58, %v310, 0
    %324 = vmatprep.subr.mxu0 %v320
    %325 = vmatpush1.msra.mxu0 %v319
    %326 = vmatprep.subr.mxu0 0.0
    %327 = vmatpush1.msra.mxu0 0.0
    %328 = vmatprep.subr.mxu0 0.0
    %329 = vmatpush1.msra.mxu0 0.0
    %330 = vmatprep.subr.mxu0 0.0
    %331 = vmatpush1.msra.mxu0 0.0
    %332 = vmatprep.subr.mxu0 0.0
    %333 = vmatpush1.msra.mxu0 0.0
    %334 = vmatprep.subr.mxu0 0.0
    %335 = vmatpush1.msra.mxu0 0.0
    %336 = vmatprep.subr.mxu0 0.0
    %337 = vmatpush1.msra.mxu0 0.0
    %338 = vmatprep.subr.mxu0 0.0
    %339 = vmatpush1.msra.mxu0 0.0
    %340 = vmatprep.subr.mxu0 0.0
    %341 = vmatpush1.msra.mxu0 0.0
    %342 = vmatprep.subr.mxu0 0.0
    %343 = vmatpush1.msra.mxu0 0.0
    %344 = vmatprep.subr.mxu0 0.0
    %345 = vmatpush1.msra.mxu0 0.0
    %346 = vmatprep.subr.mxu0 0.0
    %347 = vmatpush1.msra.mxu0 0.0
    %348 = vmatprep.subr.mxu0 0.0
    %349 = vmatpush1.msra.mxu0 0.0
    %350 = vmatprep.subr.mxu0 0.0
    %351 = vmatpush1.msra.mxu0 0.0
    %352 = vmatprep.subr.mxu0 0.0
    %353 = vmatpush1.msra.mxu0 0.0
    %354 = vmatprep.subr.mxu0 0.0
    %355 = vmatpush1.msra.mxu0 0.0
    %356 = vmatprep.subr.mxu0 0.0
    %357 = vmatpush1.msra.mxu0 0.0
    %358 = vmatprep.subr.mxu0 0.0
    %359 = vmatpush1.msra.mxu0 0.0
    %360 = vmatprep.subr.mxu0 0.0
    %361 = vmatpush1.msra.mxu0 0.0
    %362 = vmatprep.subr.mxu0 0.0
    %363 = vmatpush1.msra.mxu0 0.0
    %364 = vmatprep.subr.mxu0 0.0
    %365 = vmatpush1.msra.mxu0 0.0
    %366 = vmatprep.subr.mxu0 0.0
    %367 = vmatpush1.msra.mxu0 0.0
    %368 = vmatprep.subr.mxu0 0.0
    %369 = vmatpush1.msra.mxu0 0.0
    %370 = vmatprep.subr.mxu0 0.0
    %371 = vmatpush1.msra.mxu0 0.0
    %372 = vmatprep.subr.mxu0 0.0
    %373 = vmatpush1.msra.mxu0 0.0
    %374 = vmatprep.subr.mxu0 0.0
    %375 = vmatpush1.msra.mxu0 0.0
    %376 = vmatprep.subr.mxu0 0.0
    %377 = vmatpush1.msra.mxu0 0.0
    %378 = vmatprep.subr.mxu0 0.0
    %379 = vmatpush1.msra.mxu0 0.0
    %380 = vmatprep.subr.mxu0 0.0
    %381 = vmatpush1.msra.mxu0 0.0
    %382 = vmatprep.subr.mxu0 0.0
    %383 = vmatpush1.msra.mxu0 0.0
    %384 = vmatprep.subr.mxu0 0.0
    %385 = vmatpush1.msra.mxu0 0.0
    %386 = vmatprep.subr.mxu0 0.0
    %387 = vmatpush1.msra.mxu0 0.0
    %388 = vmatprep.mubr.f32.mxu0 0.0
    %389 = vmatmul.mubr.f32.gmra.mrb[0].mxu0 %v322
    %v390 = vpop.f32.mrb[0].mxu0
    %v391 = vadd.f32 0.0, %v390
    %v392 = vpop.f32.mrb[0].mxu0
    %v393 = vadd.f32 0.0, %v392
    %394 = vdwg.mxu0
    %v395 = vadd.f32 %v300, %v391
    %v396 = vadd.f32 %v301, %v393
    %397 = vrot.lane.b32.xlu0 %v30, 1
    %v398 = vpop.permute.xlu0 %397
    %399 = vrot.lane.b32.xlu0 %v31, 1
    %v400 = vpop.permute.xlu0 %399
    %vm401 = vcmp.lt.s32.totalorder %v43, 1
    %v402 = vsel %vm401, %v398, %v400
    %v403 = vsel %vm401, %v400, %v398
    %s404 = scalar_lea.vmem %s1, 24
    %v405 = vld [vmem:[%s404] sm:$0xff]
    %v406 = vlaneseq
    %v407 = vshrl.u32 %v406, 7
    %v408 = vsub.s32 3, %v407
    %v409 = vrot.slane %v32, %v408
    %v410 = vlaneseq
    %v411 = vshrl.u32 %v410, 7
    %v412 = vsub.s32 3, %v411
    %v413 = vrot.slane %v33, %v412
    %v414 = vmul.f32 %v403, %v409
    %v415 = vmul.f32 %v402, %v413
    %v417 = vsel %vm58, %v405, 0
    %419 = vmatprep.subr.mxu0 %v415
    %420 = vmatpush1.msra.mxu0 %v414
    %421 = vmatprep.subr.mxu0 0.0
    %422 = vmatpush1.msra.mxu0 0.0
    %423 = vmatprep.subr.mxu0 0.0
    %424 = vmatpush1.msra.mxu0 0.0
    %425 = vmatprep.subr.mxu0 0.0
    %426 = vmatpush1.msra.mxu0 0.0
    %427 = vmatprep.subr.mxu0 0.0
    %428 = vmatpush1.msra.mxu0 0.0
    %429 = vmatprep.subr.mxu0 0.0
    %430 = vmatpush1.msra.mxu0 0.0
    %431 = vmatprep.subr.mxu0 0.0
    %432 = vmatpush1.msra.mxu0 0.0
    %433 = vmatprep.subr.mxu0 0.0
    %434 = vmatpush1.msra.mxu0 0.0
    %435 = vmatprep.subr.mxu0 0.0
    %436 = vmatpush1.msra.mxu0 0.0
    %437 = vmatprep.subr.mxu0 0.0
    %438 = vmatpush1.msra.mxu0 0.0
    %439 = vmatprep.subr.mxu0 0.0
    %440 = vmatpush1.msra.mxu0 0.0
    %441 = vmatprep.subr.mxu0 0.0
    %442 = vmatpush1.msra.mxu0 0.0
    %443 = vmatprep.subr.mxu0 0.0
    %444 = vmatpush1.msra.mxu0 0.0
    %445 = vmatprep.subr.mxu0 0.0
    %446 = vmatpush1.msra.mxu0 0.0
    %447 = vmatprep.subr.mxu0 0.0
    %448 = vmatpush1.msra.mxu0 0.0
    %449 = vmatprep.subr.mxu0 0.0
    %450 = vmatpush1.msra.mxu0 0.0
    %451 = vmatprep.subr.mxu0 0.0
    %452 = vmatpush1.msra.mxu0 0.0
    %453 = vmatprep.subr.mxu0 0.0
    %454 = vmatpush1.msra.mxu0 0.0
    %455 = vmatprep.subr.mxu0 0.0
    %456 = vmatpush1.msra.mxu0 0.0
    %457 = vmatprep.subr.mxu0 0.0
    %458 = vmatpush1.msra.mxu0 0.0
    %459 = vmatprep.subr.mxu0 0.0
    %460 = vmatpush1.msra.mxu0 0.0
    %461 = vmatprep.subr.mxu0 0.0
    %462 = vmatpush1.msra.mxu0 0.0
    %463 = vmatprep.subr.mxu0 0.0
    %464 = vmatpush1.msra.mxu0 0.0
    %465 = vmatprep.subr.mxu0 0.0
    %466 = vmatpush1.msra.mxu0 0.0
    %467 = vmatprep.subr.mxu0 0.0
    %468 = vmatpush1.msra.mxu0 0.0
    %469 = vmatprep.subr.mxu0 0.0
    %470 = vmatpush1.msra.mxu0 0.0
    %471 = vmatprep.subr.mxu0 0.0
    %472 = vmatpush1.msra.mxu0 0.0
    %473 = vmatprep.subr.mxu0 0.0
    %474 = vmatpush1.msra.mxu0 0.0
    %475 = vmatprep.subr.mxu0 0.0
    %476 = vmatpush1.msra.mxu0 0.0
    %477 = vmatprep.subr.mxu0 0.0
    %478 = vmatpush1.msra.mxu0 0.0
    %479 = vmatprep.subr.mxu0 0.0
    %480 = vmatpush1.msra.mxu0 0.0
    %481 = vmatprep.subr.mxu0 0.0
    %482 = vmatpush1.msra.mxu0 0.0
    %483 = vmatprep.mubr.f32.mxu0 0.0
    %484 = vmatmul.mubr.f32.gmra.mrb[0].mxu0 %v417
    %v485 = vpop.f32.mrb[0].mxu0
    %v486 = vadd.f32 0.0, %v485
    %v487 = vpop.f32.mrb[0].mxu0
    %v488 = vadd.f32 0.0, %v487
    %489 = vdwg.mxu0
    %v490 = vadd.f32 %v395, %v486
    %v491 = vadd.f32 %v396, %v488
    %492 = vrot.lane.b32.xlu0 %v30, 127
    %v493 = vpop.permute.xlu0 %492
    %494 = vrot.lane.b32.xlu0 %v31, 127
    %v495 = vpop.permute.xlu0 %494
    %vm496 = vcmp.lt.s32.totalorder %v43, 127
    %v497 = vsel %vm496, %v493, %v495
    %v498 = vsel %vm496, %v495, %v493
    %s499 = scalar_lea.vmem %s1, 40
    %v500 = vld [vmem:[%s499] sm:$0xff]
    %v501 = vlaneseq
    %v502 = vshrl.u32 %v501, 7
    %v503 = vsub.s32 5, %v502
    %v504 = vrot.slane %v32, %v503
    %v505 = vlaneseq
    %v506 = vshrl.u32 %v505, 7
    %v507 = vsub.s32 5, %v506
    %v508 = vrot.slane %v33, %v507
    %v509 = vmul.f32 %v497, %v504
    %v510 = vmul.f32 %v498, %v508
    %v512 = vsel %vm58, %v500, 0
    %514 = vmatprep.subr.mxu0 %v510
    %515 = vmatpush1.msra.mxu0 %v509
    %516 = vmatprep.subr.mxu0 0.0
    %517 = vmatpush1.msra.mxu0 0.0
    %518 = vmatprep.subr.mxu0 0.0
    %519 = vmatpush1.msra.mxu0 0.0
    %520 = vmatprep.subr.mxu0 0.0
    %521 = vmatpush1.msra.mxu0 0.0
    %522 = vmatprep.subr.mxu0 0.0
    %523 = vmatpush1.msra.mxu0 0.0
    %524 = vmatprep.subr.mxu0 0.0
    %525 = vmatpush1.msra.mxu0 0.0
    %526 = vmatprep.subr.mxu0 0.0
    %527 = vmatpush1.msra.mxu0 0.0
    %528 = vmatprep.subr.mxu0 0.0
    %529 = vmatpush1.msra.mxu0 0.0
    %530 = vmatprep.subr.mxu0 0.0
    %531 = vmatpush1.msra.mxu0 0.0
    %532 = vmatprep.subr.mxu0 0.0
    %533 = vmatpush1.msra.mxu0 0.0
    %534 = vmatprep.subr.mxu0 0.0
    %535 = vmatpush1.msra.mxu0 0.0
    %536 = vmatprep.subr.mxu0 0.0
    %537 = vmatpush1.msra.mxu0 0.0
    %538 = vmatprep.subr.mxu0 0.0
    %539 = vmatpush1.msra.mxu0 0.0
    %540 = vmatprep.subr.mxu0 0.0
    %541 = vmatpush1.msra.mxu0 0.0
    %542 = vmatprep.subr.mxu0 0.0
    %543 = vmatpush1.msra.mxu0 0.0
    %544 = vmatprep.subr.mxu0 0.0
    %545 = vmatpush1.msra.mxu0 0.0
    %546 = vmatprep.subr.mxu0 0.0
    %547 = vmatpush1.msra.mxu0 0.0
    %548 = vmatprep.subr.mxu0 0.0
    %549 = vmatpush1.msra.mxu0 0.0
    %550 = vmatprep.subr.mxu0 0.0
    %551 = vmatpush1.msra.mxu0 0.0
    %552 = vmatprep.subr.mxu0 0.0
    %553 = vmatpush1.msra.mxu0 0.0
    %554 = vmatprep.subr.mxu0 0.0
    %555 = vmatpush1.msra.mxu0 0.0
    %556 = vmatprep.subr.mxu0 0.0
    %557 = vmatpush1.msra.mxu0 0.0
    %558 = vmatprep.subr.mxu0 0.0
    %559 = vmatpush1.msra.mxu0 0.0
    %560 = vmatprep.subr.mxu0 0.0
    %561 = vmatpush1.msra.mxu0 0.0
    %562 = vmatprep.subr.mxu0 0.0
    %563 = vmatpush1.msra.mxu0 0.0
    %564 = vmatprep.subr.mxu0 0.0
    %565 = vmatpush1.msra.mxu0 0.0
    %566 = vmatprep.subr.mxu0 0.0
    %567 = vmatpush1.msra.mxu0 0.0
    %568 = vmatprep.subr.mxu0 0.0
    %569 = vmatpush1.msra.mxu0 0.0
    %570 = vmatprep.subr.mxu0 0.0
    %571 = vmatpush1.msra.mxu0 0.0
    %572 = vmatprep.subr.mxu0 0.0
    %573 = vmatpush1.msra.mxu0 0.0
    %574 = vmatprep.subr.mxu0 0.0
    %575 = vmatpush1.msra.mxu0 0.0
    %576 = vmatprep.subr.mxu0 0.0
    %577 = vmatpush1.msra.mxu0 0.0
    %578 = vmatprep.mubr.f32.mxu0 0.0
    %579 = vmatmul.mubr.f32.gmra.mrb[0].mxu0 %v512
    %v580 = vpop.f32.mrb[0].mxu0
    %v581 = vadd.f32 0.0, %v580
    %v582 = vpop.f32.mrb[0].mxu0
    %v583 = vadd.f32 0.0, %v582
    %584 = vdwg.mxu0
    %v585 = vadd.f32 %v490, %v581
    %v586 = vadd.f32 %v491, %v583
    %587 = vrot.lane.b32.xlu0 %v30, 113
    %v588 = vpop.permute.xlu0 %587
    %589 = vrot.lane.b32.xlu0 %v31, 113
    %v590 = vpop.permute.xlu0 %589
    %vm591 = vcmp.lt.s32.totalorder %v43, 113
    %v592 = vsel %vm591, %v588, %v590
    %v593 = vsel %vm591, %v590, %v588
    %s594 = scalar_lea.vmem %s1, 48
    %v595 = vld [vmem:[%s594] sm:$0xff]
    %v596 = vlaneseq
    %v597 = vshrl.u32 %v596, 7
    %v598 = vsub.s32 6, %v597
    %v599 = vrot.slane %v32, %v598
    %v600 = vlaneseq
    %v601 = vshrl.u32 %v600, 7
    %v602 = vsub.s32 6, %v601
    %v603 = vrot.slane %v33, %v602
    %v604 = vmul.f32 %v592, %v599
    %v605 = vmul.f32 %v593, %v603
    %v607 = vsel %vm58, %v595, 0
    %609 = vmatprep.subr.mxu0 %v605
    %610 = vmatpush1.msra.mxu0 %v604
    %611 = vmatprep.subr.mxu0 0.0
    %612 = vmatpush1.msra.mxu0 0.0
    %613 = vmatprep.subr.mxu0 0.0
    %614 = vmatpush1.msra.mxu0 0.0
    %615 = vmatprep.subr.mxu0 0.0
    %616 = vmatpush1.msra.mxu0 0.0
    %617 = vmatprep.subr.mxu0 0.0
    %618 = vmatpush1.msra.mxu0 0.0
    %619 = vmatprep.subr.mxu0 0.0
    %620 = vmatpush1.msra.mxu0 0.0
    %621 = vmatprep.subr.mxu0 0.0
    %622 = vmatpush1.msra.mxu0 0.0
    %623 = vmatprep.subr.mxu0 0.0
    %624 = vmatpush1.msra.mxu0 0.0
    %625 = vmatprep.subr.mxu0 0.0
    %626 = vmatpush1.msra.mxu0 0.0
    %627 = vmatprep.subr.mxu0 0.0
    %628 = vmatpush1.msra.mxu0 0.0
    %629 = vmatprep.subr.mxu0 0.0
    %630 = vmatpush1.msra.mxu0 0.0
    %631 = vmatprep.subr.mxu0 0.0
    %632 = vmatpush1.msra.mxu0 0.0
    %633 = vmatprep.subr.mxu0 0.0
    %634 = vmatpush1.msra.mxu0 0.0
    %635 = vmatprep.subr.mxu0 0.0
    %636 = vmatpush1.msra.mxu0 0.0
    %637 = vmatprep.subr.mxu0 0.0
    %638 = vmatpush1.msra.mxu0 0.0
    %639 = vmatprep.subr.mxu0 0.0
    %640 = vmatpush1.msra.mxu0 0.0
    %641 = vmatprep.subr.mxu0 0.0
    %642 = vmatpush1.msra.mxu0 0.0
    %643 = vmatprep.subr.mxu0 0.0
    %644 = vmatpush1.msra.mxu0 0.0
    %645 = vmatprep.subr.mxu0 0.0
    %646 = vmatpush1.msra.mxu0 0.0
    %647 = vmatprep.subr.mxu0 0.0
    %648 = vmatpush1.msra.mxu0 0.0
    %649 = vmatprep.subr.mxu0 0.0
    %650 = vmatpush1.msra.mxu0 0.0
    %651 = vmatprep.subr.mxu0 0.0
    %652 = vmatpush1.msra.mxu0 0.0
    %653 = vmatprep.subr.mxu0 0.0
    %654 = vmatpush1.msra.mxu0 0.0
    %655 = vmatprep.subr.mxu0 0.0
    %656 = vmatpush1.msra.mxu0 0.0
    %657 = vmatprep.subr.mxu0 0.0
    %658 = vmatpush1.msra.mxu0 0.0
    %659 = vmatprep.subr.mxu0 0.0
    %660 = vmatpush1.msra.mxu0 0.0
    %661 = vmatprep.subr.mxu0 0.0
    %662 = vmatpush1.msra.mxu0 0.0
    %663 = vmatprep.subr.mxu0 0.0
    %664 = vmatpush1.msra.mxu0 0.0
    %665 = vmatprep.subr.mxu0 0.0
    %666 = vmatpush1.msra.mxu0 0.0
    %667 = vmatprep.subr.mxu0 0.0
    %668 = vmatpush1.msra.mxu0 0.0
    %669 = vmatprep.subr.mxu0 0.0
    %670 = vmatpush1.msra.mxu0 0.0
    %671 = vmatprep.subr.mxu0 0.0
    %672 = vmatpush1.msra.mxu0 0.0
    %673 = vmatprep.mubr.f32.mxu0 0.0
    %674 = vmatmul.mubr.f32.gmra.mrb[0].mxu0 %v607
    %v675 = vpop.f32.mrb[0].mxu0
    %v676 = vadd.f32 0.0, %v675
    %v677 = vpop.f32.mrb[0].mxu0
    %v678 = vadd.f32 0.0, %v677
    %679 = vdwg.mxu0
    %v680 = vadd.f32 %v585, %v676
    %v681 = vadd.f32 %v586, %v678
    %682 = vrot.lane.b32.xlu0 %v30, 112
    %v683 = vpop.permute.xlu0 %682
    %684 = vrot.lane.b32.xlu0 %v31, 112
    %v685 = vpop.permute.xlu0 %684
    %vm686 = vcmp.lt.s32.totalorder %v43, 112
    %v687 = vsel %vm686, %v683, %v685
    %v688 = vsel %vm686, %v685, %v683
    %s689 = scalar_lea.vmem %s1, 56
    %v690 = vld [vmem:[%s689] sm:$0xff]
    %v691 = vlaneseq
    %v692 = vshrl.u32 %v691, 7
    %v693 = vsub.s32 7, %v692
    %v694 = vrot.slane %v32, %v693
    %v695 = vlaneseq
    %v696 = vshrl.u32 %v695, 7
    %v697 = vsub.s32 7, %v696
    %v698 = vrot.slane %v33, %v697
    %v699 = vmul.f32 %v687, %v694
    %v700 = vmul.f32 %v688, %v698
    %v702 = vsel %vm58, %v690, 0
    %704 = vmatprep.subr.mxu0 %v700
    %705 = vmatpush1.msra.mxu0 %v699
    %706 = vmatprep.subr.mxu0 0.0
    %707 = vmatpush1.msra.mxu0 0.0
    %708 = vmatprep.subr.mxu0 0.0
    %709 = vmatpush1.msra.mxu0 0.0
    %710 = vmatprep.subr.mxu0 0.0
    %711 = vmatpush1.msra.mxu0 0.0
    %712 = vmatprep.subr.mxu0 0.0
    %713 = vmatpush1.msra.mxu0 0.0
    %714 = vmatprep.subr.mxu0 0.0
    %715 = vmatpush1.msra.mxu0 0.0
    %716 = vmatprep.subr.mxu0 0.0
    %717 = vmatpush1.msra.mxu0 0.0
    %718 = vmatprep.subr.mxu0 0.0
    %719 = vmatpush1.msra.mxu0 0.0
    %720 = vmatprep.subr.mxu0 0.0
    %721 = vmatpush1.msra.mxu0 0.0
    %722 = vmatprep.subr.mxu0 0.0
    %723 = vmatpush1.msra.mxu0 0.0
    %724 = vmatprep.subr.mxu0 0.0
    %725 = vmatpush1.msra.mxu0 0.0
    %726 = vmatprep.subr.mxu0 0.0
    %727 = vmatpush1.msra.mxu0 0.0
    %728 = vmatprep.subr.mxu0 0.0
    %729 = vmatpush1.msra.mxu0 0.0
    %730 = vmatprep.subr.mxu0 0.0
    %731 = vmatpush1.msra.mxu0 0.0
    %732 = vmatprep.subr.mxu0 0.0
    %733 = vmatpush1.msra.mxu0 0.0
    %734 = vmatprep.subr.mxu0 0.0
    %735 = vmatpush1.msra.mxu0 0.0
    %736 = vmatprep.subr.mxu0 0.0
    %737 = vmatpush1.msra.mxu0 0.0
    %738 = vmatprep.subr.mxu0 0.0
    %739 = vmatpush1.msra.mxu0 0.0
    %740 = vmatprep.subr.mxu0 0.0
    %741 = vmatpush1.msra.mxu0 0.0
    %742 = vmatprep.subr.mxu0 0.0
    %743 = vmatpush1.msra.mxu0 0.0
    %744 = vmatprep.subr.mxu0 0.0
    %745 = vmatpush1.msra.mxu0 0.0
    %746 = vmatprep.subr.mxu0 0.0
    %747 = vmatpush1.msra.mxu0 0.0
    %748 = vmatprep.subr.mxu0 0.0
    %749 = vmatpush1.msra.mxu0 0.0
    %750 = vmatprep.subr.mxu0 0.0
    %751 = vmatpush1.msra.mxu0 0.0
    %752 = vmatprep.subr.mxu0 0.0
    %753 = vmatpush1.msra.mxu0 0.0
    %754 = vmatprep.subr.mxu0 0.0
    %755 = vmatpush1.msra.mxu0 0.0
    %756 = vmatprep.subr.mxu0 0.0
    %757 = vmatpush1.msra.mxu0 0.0
    %758 = vmatprep.subr.mxu0 0.0
    %759 = vmatpush1.msra.mxu0 0.0
    %760 = vmatprep.subr.mxu0 0.0
    %761 = vmatpush1.msra.mxu0 0.0
    %762 = vmatprep.subr.mxu0 0.0
    %763 = vmatpush1.msra.mxu0 0.0
    %764 = vmatprep.subr.mxu0 0.0
    %765 = vmatpush1.msra.mxu0 0.0
    %766 = vmatprep.subr.mxu0 0.0
    %767 = vmatpush1.msra.mxu0 0.0
    %768 = vmatprep.mubr.f32.mxu0 0.0
    %769 = vmatmul.mubr.f32.gmra.mrb[0].mxu0 %v702
    %v770 = vpop.f32.mrb[0].mxu0
    %v771 = vadd.f32 0.0, %v770
    %v772 = vpop.f32.mrb[0].mxu0
    %v773 = vadd.f32 0.0, %v772
    %774 = vdwg.mxu0
    %v775 = vadd.f32 %v680, %v771
    %v776 = vadd.f32 %v681, %v773
    %777 = vrot.lane.b32.xlu0 %v30, 111
    %v778 = vpop.permute.xlu0 %777
    %779 = vrot.lane.b32.xlu0 %v31, 111
    %v780 = vpop.permute.xlu0 %779
    %vm781 = vcmp.lt.s32.totalorder %v43, 111
    %v782 = vsel %vm781, %v778, %v780
    %v783 = vsel %vm781, %v780, %v778
    %s784 = scalar_lea.vmem %s1, 64
    %v785 = vld [vmem:[%s784] sm:$0xff]
    %v786 = vlaneseq
    %v787 = vshrl.u32 %v786, 7
    %v788 = vsub.s32 0, %v787
    %v789 = vrot.slane %v34, %v788
    %v790 = vlaneseq
    %v791 = vshrl.u32 %v790, 7
    %v792 = vsub.s32 0, %v791
    %v793 = vrot.slane %v35, %v792
    %v794 = vmul.f32 %v782, %v789
    %v795 = vmul.f32 %v783, %v793
    %v797 = vsel %vm58, %v785, 0
    %799 = vmatprep.subr.mxu0 %v795
    %800 = vmatpush1.msra.mxu0 %v794
    %801 = vmatprep.subr.mxu0 0.0
    %802 = vmatpush1.msra.mxu0 0.0
    %803 = vmatprep.subr.mxu0 0.0
    %804 = vmatpush1.msra.mxu0 0.0
    %805 = vmatprep.subr.mxu0 0.0
    %806 = vmatpush1.msra.mxu0 0.0
    %807 = vmatprep.subr.mxu0 0.0
    %808 = vmatpush1.msra.mxu0 0.0
    %809 = vmatprep.subr.mxu0 0.0
    %810 = vmatpush1.msra.mxu0 0.0
    %811 = vmatprep.subr.mxu0 0.0
    %812 = vmatpush1.msra.mxu0 0.0
    %813 = vmatprep.subr.mxu0 0.0
    %814 = vmatpush1.msra.mxu0 0.0
    %815 = vmatprep.subr.mxu0 0.0
    %816 = vmatpush1.msra.mxu0 0.0
    %817 = vmatprep.subr.mxu0 0.0
    %818 = vmatpush1.msra.mxu0 0.0
    %819 = vmatprep.subr.mxu0 0.0
    %820 = vmatpush1.msra.mxu0 0.0
    %821 = vmatprep.subr.mxu0 0.0
    %822 = vmatpush1.msra.mxu0 0.0
    %823 = vmatprep.subr.mxu0 0.0
    %824 = vmatpush1.msra.mxu0 0.0
    %825 = vmatprep.subr.mxu0 0.0
    %826 = vmatpush1.msra.mxu0 0.0
    %827 = vmatprep.subr.mxu0 0.0
    %828 = vmatpush1.msra.mxu0 0.0
    %829 = vmatprep.subr.mxu0 0.0
    %830 = vmatpush1.msra.mxu0 0.0
    %831 = vmatprep.subr.mxu0 0.0
    %832 = vmatpush1.msra.mxu0 0.0
    %833 = vmatprep.subr.mxu0 0.0
    %834 = vmatpush1.msra.mxu0 0.0
    %835 = vmatprep.subr.mxu0 0.0
    %836 = vmatpush1.msra.mxu0 0.0
    %837 = vmatprep.subr.mxu0 0.0
    %838 = vmatpush1.msra.mxu0 0.0
    %839 = vmatprep.subr.mxu0 0.0
    %840 = vmatpush1.msra.mxu0 0.0
    %841 = vmatprep.subr.mxu0 0.0
    %842 = vmatpush1.msra.mxu0 0.0
    %843 = vmatprep.subr.mxu0 0.0
    %844 = vmatpush1.msra.mxu0 0.0
    %845 = vmatprep.subr.mxu0 0.0
    %846 = vmatpush1.msra.mxu0 0.0
    %847 = vmatprep.subr.mxu0 0.0
    %848 = vmatpush1.msra.mxu0 0.0
    %849 = vmatprep.subr.mxu0 0.0
    %850 = vmatpush1.msra.mxu0 0.0
    %851 = vmatprep.subr.mxu0 0.0
    %852 = vmatpush1.msra.mxu0 0.0
    %853 = vmatprep.subr.mxu0 0.0
    %854 = vmatpush1.msra.mxu0 0.0
    %855 = vmatprep.subr.mxu0 0.0
    %856 = vmatpush1.msra.mxu0 0.0
    %857 = vmatprep.subr.mxu0 0.0
    %858 = vmatpush1.msra.mxu0 0.0
    %859 = vmatprep.subr.mxu0 0.0
    %860 = vmatpush1.msra.mxu0 0.0
    %861 = vmatprep.subr.mxu0 0.0
    %862 = vmatpush1.msra.mxu0 0.0
    %863 = vmatprep.mubr.f32.mxu0 0.0
    %864 = vmatmul.mubr.f32.gmra.mrb[0].mxu0 %v797
    %v865 = vpop.f32.mrb[0].mxu0
    %v866 = vadd.f32 0.0, %v865
    %v867 = vpop.f32.mrb[0].mxu0
    %v868 = vadd.f32 0.0, %v867
    %869 = vdwg.mxu0
    %v870 = vadd.f32 %v775, %v866
    %v871 = vadd.f32 %v776, %v868
    %v872 = vld [vmem:[%s2] sm:$0xff]
    %874 = vset.pattern.permute.xlu0 0
    %875 = vperm.xlu0 %874, %v872
    %v876 = vpop.permute.xlu0 %875
    %v878 = vadd.f32 %v870, %v876
    %v879 = vadd.f32 %v871, %v876
    %v880 = vmax.f32 %v878, 0.0
    %v881 = vmax.f32 %v879, 0.0
    %s882 = scalar_lea.vmem %s3, 32
    %v883 = vld [vmem:[%s882] sm:$0xff]
    %884 = vrot.lane.b32.xlu0 %v880, 17
    %v885 = vpop.permute.xlu0 %884
    %886 = vrot.lane.b32.xlu0 %v881, 17
    %v887 = vpop.permute.xlu0 %886
    %v888 = vsel %vm44, %v885, %v887
    %v889 = vsel %vm44, %v887, %v885
    %v890 = vld [vmem:[%s3] sm:$0xff]
    %v891 = vmul.f32 %v889, %v51
    %v892 = vmul.f32 %v888, %v55
    %v894 = vsel %vm58, %v890, 0
    %896 = vmatprep.subr.mxu0 %v892
    %897 = vmatpush1.msra.mxu0 %v891
    %898 = vmatprep.subr.mxu0 0.0
    %899 = vmatpush1.msra.mxu0 0.0
    %900 = vmatprep.subr.mxu0 0.0
    %901 = vmatpush1.msra.mxu0 0.0
    %902 = vmatprep.subr.mxu0 0.0
    %903 = vmatpush1.msra.mxu0 0.0
    %904 = vmatprep.subr.mxu0 0.0
    %905 = vmatpush1.msra.mxu0 0.0
    %906 = vmatprep.subr.mxu0 0.0
    %907 = vmatpush1.msra.mxu0 0.0
    %908 = vmatprep.subr.mxu0 0.0
    %909 = vmatpush1.msra.mxu0 0.0
    %910 = vmatprep.subr.mxu0 0.0
    %911 = vmatpush1.msra.mxu0 0.0
    %912 = vmatprep.subr.mxu0 0.0
    %913 = vmatpush1.msra.mxu0 0.0
    %914 = vmatprep.subr.mxu0 0.0
    %915 = vmatpush1.msra.mxu0 0.0
    %916 = vmatprep.subr.mxu0 0.0
    %917 = vmatpush1.msra.mxu0 0.0
    %918 = vmatprep.subr.mxu0 0.0
    %919 = vmatpush1.msra.mxu0 0.0
    %920 = vmatprep.subr.mxu0 0.0
    %921 = vmatpush1.msra.mxu0 0.0
    %922 = vmatprep.subr.mxu0 0.0
    %923 = vmatpush1.msra.mxu0 0.0
    %924 = vmatprep.subr.mxu0 0.0
    %925 = vmatpush1.msra.mxu0 0.0
    %926 = vmatprep.subr.mxu0 0.0
    %927 = vmatpush1.msra.mxu0 0.0
    %928 = vmatprep.subr.mxu0 0.0
    %929 = vmatpush1.msra.mxu0 0.0
    %930 = vmatprep.subr.mxu0 0.0
    %931 = vmatpush1.msra.mxu0 0.0
    %932 = vmatprep.subr.mxu0 0.0
    %933 = vmatpush1.msra.mxu0 0.0
    %934 = vmatprep.subr.mxu0 0.0
    %935 = vmatpush1.msra.mxu0 0.0
    %936 = vmatprep.subr.mxu0 0.0
    %937 = vmatpush1.msra.mxu0 0.0
    %938 = vmatprep.subr.mxu0 0.0
    %939 = vmatpush1.msra.mxu0 0.0
    %940 = vmatprep.subr.mxu0 0.0
    %941 = vmatpush1.msra.mxu0 0.0
    %942 = vmatprep.subr.mxu0 0.0
    %943 = vmatpush1.msra.mxu0 0.0
    %944 = vmatprep.subr.mxu0 0.0
    %945 = vmatpush1.msra.mxu0 0.0
    %946 = vmatprep.subr.mxu0 0.0
    %947 = vmatpush1.msra.mxu0 0.0
    %948 = vmatprep.subr.mxu0 0.0
    %949 = vmatpush1.msra.mxu0 0.0
    %950 = vmatprep.subr.mxu0 0.0
    %951 = vmatpush1.msra.mxu0 0.0
    %952 = vmatprep.subr.mxu0 0.0
    %953 = vmatpush1.msra.mxu0 0.0
    %954 = vmatprep.subr.mxu0 0.0
    %955 = vmatpush1.msra.mxu0 0.0
    %956 = vmatprep.subr.mxu0 0.0
    %957 = vmatpush1.msra.mxu0 0.0
    %958 = vmatprep.subr.mxu0 0.0
    %959 = vmatpush1.msra.mxu0 0.0
    %960 = vmatprep.mubr.f32.mxu0 0.0
    %961 = vmatmul.mubr.f32.gmra.mrb[0].mxu0 %v894
    %v962 = vpop.f32.mrb[0].mxu0
    %v963 = vadd.f32 0.0, %v962
    %v964 = vpop.f32.mrb[0].mxu0
    %v965 = vadd.f32 0.0, %v964
    %966 = vdwg.mxu0
    %v968 = vsel %vm58, %v883, 0
    %970 = vmatprep.subr.mxu0 %v881
    %971 = vmatpush1.msra.mxu0 %v880
    %972 = vmatprep.subr.mxu0 0.0
    %973 = vmatpush1.msra.mxu0 0.0
    %974 = vmatprep.subr.mxu0 0.0
    %975 = vmatpush1.msra.mxu0 0.0
    %976 = vmatprep.subr.mxu0 0.0
    %977 = vmatpush1.msra.mxu0 0.0
    %978 = vmatprep.subr.mxu0 0.0
    %979 = vmatpush1.msra.mxu0 0.0
    %980 = vmatprep.subr.mxu0 0.0
    %981 = vmatpush1.msra.mxu0 0.0
    %982 = vmatprep.subr.mxu0 0.0
    %983 = vmatpush1.msra.mxu0 0.0
    %984 = vmatprep.subr.mxu0 0.0
    %985 = vmatpush1.msra.mxu0 0.0
    %986 = vmatprep.subr.mxu0 0.0
    %987 = vmatpush1.msra.mxu0 0.0
    %988 = vmatprep.subr.mxu0 0.0
    %989 = vmatpush1.msra.mxu0 0.0
    %990 = vmatprep.subr.mxu0 0.0
    %991 = vmatpush1.msra.mxu0 0.0
    %992 = vmatprep.subr.mxu0 0.0
    %993 = vmatpush1.msra.mxu0 0.0
    %994 = vmatprep.subr.mxu0 0.0
    %995 = vmatpush1.msra.mxu0 0.0
    %996 = vmatprep.subr.mxu0 0.0
    %997 = vmatpush1.msra.mxu0 0.0
    %998 = vmatprep.subr.mxu0 0.0
    %999 = vmatpush1.msra.mxu0 0.0
    %1000 = vmatprep.subr.mxu0 0.0
    %1001 = vmatpush1.msra.mxu0 0.0
    %1002 = vmatprep.subr.mxu0 0.0
    %1003 = vmatpush1.msra.mxu0 0.0
    %1004 = vmatprep.subr.mxu0 0.0
    %1005 = vmatpush1.msra.mxu0 0.0
    %1006 = vmatprep.subr.mxu0 0.0
    %1007 = vmatpush1.msra.mxu0 0.0
    %1008 = vmatprep.subr.mxu0 0.0
    %1009 = vmatpush1.msra.mxu0 0.0
    %1010 = vmatprep.subr.mxu0 0.0
    %1011 = vmatpush1.msra.mxu0 0.0
    %1012 = vmatprep.subr.mxu0 0.0
    %1013 = vmatpush1.msra.mxu0 0.0
    %1014 = vmatprep.subr.mxu0 0.0
    %1015 = vmatpush1.msra.mxu0 0.0
    %1016 = vmatprep.subr.mxu0 0.0
    %1017 = vmatpush1.msra.mxu0 0.0
    %1018 = vmatprep.subr.mxu0 0.0
    %1019 = vmatpush1.msra.mxu0 0.0
    %1020 = vmatprep.subr.mxu0 0.0
    %1021 = vmatpush1.msra.mxu0 0.0
    %1022 = vmatprep.subr.mxu0 0.0
    %1023 = vmatpush1.msra.mxu0 0.0
    %1024 = vmatprep.subr.mxu0 0.0
    %1025 = vmatpush1.msra.mxu0 0.0
    %1026 = vmatprep.subr.mxu0 0.0
    %1027 = vmatpush1.msra.mxu0 0.0
    %1028 = vmatprep.subr.mxu0 0.0
    %1029 = vmatpush1.msra.mxu0 0.0
    %1030 = vmatprep.subr.mxu0 0.0
    %1031 = vmatpush1.msra.mxu0 0.0
    %1032 = vmatprep.subr.mxu0 0.0
    %1033 = vmatpush1.msra.mxu0 0.0
    %1034 = vmatprep.mubr.f32.mxu0 0.0
    %1035 = vmatmul.mubr.f32.gmra.mrb[0].mxu0 %v968
    %v1036 = vpop.f32.mrb[0].mxu0
    %v1037 = vadd.f32 %v963, %v1036
    %v1038 = vpop.f32.mrb[0].mxu0
    %v1039 = vadd.f32 %v965, %v1038
    %1040 = vdwg.mxu0
    %1041 = vrot.lane.b32.xlu0 %v880, 16
    %v1042 = vpop.permute.xlu0 %1041
    %1043 = vrot.lane.b32.xlu0 %v881, 16
    %v1044 = vpop.permute.xlu0 %1043
    %v1045 = vsel %vm211, %v1042, %v1044
    %v1046 = vsel %vm211, %v1044, %v1042
    %s1047 = scalar_lea.vmem %s3, 8
    %v1048 = vld [vmem:[%s1047] sm:$0xff]
    %v1049 = vmul.f32 %v1046, %v219
    %v1050 = vmul.f32 %v1045, %v223
    %v1052 = vsel %vm58, %v1048, 0
    %1054 = vmatprep.subr.mxu0 %v1050
    %1055 = vmatpush1.msra.mxu0 %v1049
    %1056 = vmatprep.subr.mxu0 0.0
    %1057 = vmatpush1.msra.mxu0 0.0
    %1058 = vmatprep.subr.mxu0 0.0
    %1059 = vmatpush1.msra.mxu0 0.0
    %1060 = vmatprep.subr.mxu0 0.0
    %1061 = vmatpush1.msra.mxu0 0.0
    %1062 = vmatprep.subr.mxu0 0.0
    %1063 = vmatpush1.msra.mxu0 0.0
    %1064 = vmatprep.subr.mxu0 0.0
    %1065 = vmatpush1.msra.mxu0 0.0
    %1066 = vmatprep.subr.mxu0 0.0
    %1067 = vmatpush1.msra.mxu0 0.0
    %1068 = vmatprep.subr.mxu0 0.0
    %1069 = vmatpush1.msra.mxu0 0.0
    %1070 = vmatprep.subr.mxu0 0.0
    %1071 = vmatpush1.msra.mxu0 0.0
    %1072 = vmatprep.subr.mxu0 0.0
    %1073 = vmatpush1.msra.mxu0 0.0
    %1074 = vmatprep.subr.mxu0 0.0
    %1075 = vmatpush1.msra.mxu0 0.0
    %1076 = vmatprep.subr.mxu0 0.0
    %1077 = vmatpush1.msra.mxu0 0.0
    %1078 = vmatprep.subr.mxu0 0.0
    %1079 = vmatpush1.msra.mxu0 0.0
    %1080 = vmatprep.subr.mxu0 0.0
    %1081 = vmatpush1.msra.mxu0 0.0
    %1082 = vmatprep.subr.mxu0 0.0
    %1083 = vmatpush1.msra.mxu0 0.0
    %1084 = vmatprep.subr.mxu0 0.0
    %1085 = vmatpush1.msra.mxu0 0.0
    %1086 = vmatprep.subr.mxu0 0.0
    %1087 = vmatpush1.msra.mxu0 0.0
    %1088 = vmatprep.subr.mxu0 0.0
    %1089 = vmatpush1.msra.mxu0 0.0
    %1090 = vmatprep.subr.mxu0 0.0
    %1091 = vmatpush1.msra.mxu0 0.0
    %1092 = vmatprep.subr.mxu0 0.0
    %1093 = vmatpush1.msra.mxu0 0.0
    %1094 = vmatprep.subr.mxu0 0.0
    %1095 = vmatpush1.msra.mxu0 0.0
    %1096 = vmatprep.subr.mxu0 0.0
    %1097 = vmatpush1.msra.mxu0 0.0
    %1098 = vmatprep.subr.mxu0 0.0
    %1099 = vmatpush1.msra.mxu0 0.0
    %1100 = vmatprep.subr.mxu0 0.0
    %1101 = vmatpush1.msra.mxu0 0.0
    %1102 = vmatprep.subr.mxu0 0.0
    %1103 = vmatpush1.msra.mxu0 0.0
    %1104 = vmatprep.subr.mxu0 0.0
    %1105 = vmatpush1.msra.mxu0 0.0
    %1106 = vmatprep.subr.mxu0 0.0
    %1107 = vmatpush1.msra.mxu0 0.0
    %1108 = vmatprep.subr.mxu0 0.0
    %1109 = vmatpush1.msra.mxu0 0.0
    %1110 = vmatprep.subr.mxu0 0.0
    %1111 = vmatpush1.msra.mxu0 0.0
    %1112 = vmatprep.subr.mxu0 0.0
    %1113 = vmatpush1.msra.mxu0 0.0
    %1114 = vmatprep.subr.mxu0 0.0
    %1115 = vmatpush1.msra.mxu0 0.0
    %1116 = vmatprep.subr.mxu0 0.0
    %1117 = vmatpush1.msra.mxu0 0.0
    %1118 = vmatprep.mubr.f32.mxu0 0.0
    %1119 = vmatmul.mubr.f32.gmra.mrb[0].mxu0 %v1052
    %v1120 = vpop.f32.mrb[0].mxu0
    %v1121 = vadd.f32 0.0, %v1120
    %v1122 = vpop.f32.mrb[0].mxu0
    %v1123 = vadd.f32 0.0, %v1122
    %1124 = vdwg.mxu0
    %v1125 = vadd.f32 %v1037, %v1121
    %v1126 = vadd.f32 %v1039, %v1123
    %1127 = vrot.lane.b32.xlu0 %v880, 15
    %v1128 = vpop.permute.xlu0 %1127
    %1129 = vrot.lane.b32.xlu0 %v881, 15
    %v1130 = vpop.permute.xlu0 %1129
    %v1131 = vsel %vm306, %v1128, %v1130
    %v1132 = vsel %vm306, %v1130, %v1128
    %s1133 = scalar_lea.vmem %s3, 16
    %v1134 = vld [vmem:[%s1133] sm:$0xff]
    %v1135 = vmul.f32 %v1132, %v314
    %v1136 = vmul.f32 %v1131, %v318
    %v1138 = vsel %vm58, %v1134, 0
    %1140 = vmatprep.subr.mxu0 %v1136
    %1141 = vmatpush1.msra.mxu0 %v1135
    %1142 = vmatprep.subr.mxu0 0.0
    %1143 = vmatpush1.msra.mxu0 0.0
    %1144 = vmatprep.subr.mxu0 0.0
    %1145 = vmatpush1.msra.mxu0 0.0
    %1146 = vmatprep.subr.mxu0 0.0
    %1147 = vmatpush1.msra.mxu0 0.0
    %1148 = vmatprep.subr.mxu0 0.0
    %1149 = vmatpush1.msra.mxu0 0.0
    %1150 = vmatprep.subr.mxu0 0.0
    %1151 = vmatpush1.msra.mxu0 0.0
    %1152 = vmatprep.subr.mxu0 0.0
    %1153 = vmatpush1.msra.mxu0 0.0
    %1154 = vmatprep.subr.mxu0 0.0
    %1155 = vmatpush1.msra.mxu0 0.0
    %1156 = vmatprep.subr.mxu0 0.0
    %1157 = vmatpush1.msra.mxu0 0.0
    %1158 = vmatprep.subr.mxu0 0.0
    %1159 = vmatpush1.msra.mxu0 0.0
    %1160 = vmatprep.subr.mxu0 0.0
    %1161 = vmatpush1.msra.mxu0 0.0
    %1162 = vmatprep.subr.mxu0 0.0
    %1163 = vmatpush1.msra.mxu0 0.0
    %1164 = vmatprep.subr.mxu0 0.0
    %1165 = vmatpush1.msra.mxu0 0.0
    %1166 = vmatprep.subr.mxu0 0.0
    %1167 = vmatpush1.msra.mxu0 0.0
    %1168 = vmatprep.subr.mxu0 0.0
    %1169 = vmatpush1.msra.mxu0 0.0
    %1170 = vmatprep.subr.mxu0 0.0
    %1171 = vmatpush1.msra.mxu0 0.0
    %1172 = vmatprep.subr.mxu0 0.0
    %1173 = vmatpush1.msra.mxu0 0.0
    %1174 = vmatprep.subr.mxu0 0.0
    %1175 = vmatpush1.msra.mxu0 0.0
    %1176 = vmatprep.subr.mxu0 0.0
    %1177 = vmatpush1.msra.mxu0 0.0
    %1178 = vmatprep.subr.mxu0 0.0
    %1179 = vmatpush1.msra.mxu0 0.0
    %1180 = vmatprep.subr.mxu0 0.0
    %1181 = vmatpush1.msra.mxu0 0.0
    %1182 = vmatprep.subr.mxu0 0.0
    %1183 = vmatpush1.msra.mxu0 0.0
    %1184 = vmatprep.subr.mxu0 0.0
    %1185 = vmatpush1.msra.mxu0 0.0
    %1186 = vmatprep.subr.mxu0 0.0
    %1187 = vmatpush1.msra.mxu0 0.0
    %1188 = vmatprep.subr.mxu0 0.0
    %1189 = vmatpush1.msra.mxu0 0.0
    %1190 = vmatprep.subr.mxu0 0.0
    %1191 = vmatpush1.msra.mxu0 0.0
    %1192 = vmatprep.subr.mxu0 0.0
    %1193 = vmatpush1.msra.mxu0 0.0
    %1194 = vmatprep.subr.mxu0 0.0
    %1195 = vmatpush1.msra.mxu0 0.0
    %1196 = vmatprep.subr.mxu0 0.0
    %1197 = vmatpush1.msra.mxu0 0.0
    %1198 = vmatprep.subr.mxu0 0.0
    %1199 = vmatpush1.msra.mxu0 0.0
    %1200 = vmatprep.subr.mxu0 0.0
    %1201 = vmatpush1.msra.mxu0 0.0
    %1202 = vmatprep.subr.mxu0 0.0
    %1203 = vmatpush1.msra.mxu0 0.0
    %1204 = vmatprep.mubr.f32.mxu0 0.0
    %1205 = vmatmul.mubr.f32.gmra.mrb[0].mxu0 %v1138
    %v1206 = vpop.f32.mrb[0].mxu0
    %v1207 = vadd.f32 0.0, %v1206
    %v1208 = vpop.f32.mrb[0].mxu0
    %v1209 = vadd.f32 0.0, %v1208
    %1210 = vdwg.mxu0
    %v1211 = vadd.f32 %v1125, %v1207
    %v1212 = vadd.f32 %v1126, %v1209
    %1213 = vrot.lane.b32.xlu0 %v880, 1
    %v1214 = vpop.permute.xlu0 %1213
    %1215 = vrot.lane.b32.xlu0 %v881, 1
    %v1216 = vpop.permute.xlu0 %1215
    %v1217 = vsel %vm401, %v1214, %v1216
    %v1218 = vsel %vm401, %v1216, %v1214
    %s1219 = scalar_lea.vmem %s3, 24
    %v1220 = vld [vmem:[%s1219] sm:$0xff]
    %v1221 = vmul.f32 %v1218, %v409
    %v1222 = vmul.f32 %v1217, %v413
    %v1224 = vsel %vm58, %v1220, 0
    %1226 = vmatprep.subr.mxu0 %v1222
    %1227 = vmatpush1.msra.mxu0 %v1221
    %1228 = vmatprep.subr.mxu0 0.0
    %1229 = vmatpush1.msra.mxu0 0.0
    %1230 = vmatprep.subr.mxu0 0.0
    %1231 = vmatpush1.msra.mxu0 0.0
    %1232 = vmatprep.subr.mxu0 0.0
    %1233 = vmatpush1.msra.mxu0 0.0
    %1234 = vmatprep.subr.mxu0 0.0
    %1235 = vmatpush1.msra.mxu0 0.0
    %1236 = vmatprep.subr.mxu0 0.0
    %1237 = vmatpush1.msra.mxu0 0.0
    %1238 = vmatprep.subr.mxu0 0.0
    %1239 = vmatpush1.msra.mxu0 0.0
    %1240 = vmatprep.subr.mxu0 0.0
    %1241 = vmatpush1.msra.mxu0 0.0
    %1242 = vmatprep.subr.mxu0 0.0
    %1243 = vmatpush1.msra.mxu0 0.0
    %1244 = vmatprep.subr.mxu0 0.0
    %1245 = vmatpush1.msra.mxu0 0.0
    %1246 = vmatprep.subr.mxu0 0.0
    %1247 = vmatpush1.msra.mxu0 0.0
    %1248 = vmatprep.subr.mxu0 0.0
    %1249 = vmatpush1.msra.mxu0 0.0
    %1250 = vmatprep.subr.mxu0 0.0
    %1251 = vmatpush1.msra.mxu0 0.0
    %1252 = vmatprep.subr.mxu0 0.0
    %1253 = vmatpush1.msra.mxu0 0.0
    %1254 = vmatprep.subr.mxu0 0.0
    %1255 = vmatpush1.msra.mxu0 0.0
    %1256 = vmatprep.subr.mxu0 0.0
    %1257 = vmatpush1.msra.mxu0 0.0
    %1258 = vmatprep.subr.mxu0 0.0
    %1259 = vmatpush1.msra.mxu0 0.0
    %1260 = vmatprep.subr.mxu0 0.0
    %1261 = vmatpush1.msra.mxu0 0.0
    %1262 = vmatprep.subr.mxu0 0.0
    %1263 = vmatpush1.msra.mxu0 0.0
    %1264 = vmatprep.subr.mxu0 0.0
    %1265 = vmatpush1.msra.mxu0 0.0
    %1266 = vmatprep.subr.mxu0 0.0
    %1267 = vmatpush1.msra.mxu0 0.0
    %1268 = vmatprep.subr.mxu0 0.0
    %1269 = vmatpush1.msra.mxu0 0.0
    %1270 = vmatprep.subr.mxu0 0.0
    %1271 = vmatpush1.msra.mxu0 0.0
    %1272 = vmatprep.subr.mxu0 0.0
    %1273 = vmatpush1.msra.mxu0 0.0
    %1274 = vmatprep.subr.mxu0 0.0
    %1275 = vmatpush1.msra.mxu0 0.0
    %1276 = vmatprep.subr.mxu0 0.0
    %1277 = vmatpush1.msra.mxu0 0.0
    %1278 = vmatprep.subr.mxu0 0.0
    %1279 = vmatpush1.msra.mxu0 0.0
    %1280 = vmatprep.subr.mxu0 0.0
    %1281 = vmatpush1.msra.mxu0 0.0
    %1282 = vmatprep.subr.mxu0 0.0
    %1283 = vmatpush1.msra.mxu0 0.0
    %1284 = vmatprep.subr.mxu0 0.0
    %1285 = vmatpush1.msra.mxu0 0.0
    %1286 = vmatprep.subr.mxu0 0.0
    %1287 = vmatpush1.msra.mxu0 0.0
    %1288 = vmatprep.subr.mxu0 0.0
    %1289 = vmatpush1.msra.mxu0 0.0
    %1290 = vmatprep.mubr.f32.mxu0 0.0
    %1291 = vmatmul.mubr.f32.gmra.mrb[0].mxu0 %v1224
    %v1292 = vpop.f32.mrb[0].mxu0
    %v1293 = vadd.f32 0.0, %v1292
    %v1294 = vpop.f32.mrb[0].mxu0
    %v1295 = vadd.f32 0.0, %v1294
    %1296 = vdwg.mxu0
    %v1297 = vadd.f32 %v1211, %v1293
    %v1298 = vadd.f32 %v1212, %v1295
    %1299 = vrot.lane.b32.xlu0 %v880, 127
    %v1300 = vpop.permute.xlu0 %1299
    %1301 = vrot.lane.b32.xlu0 %v881, 127
    %v1302 = vpop.permute.xlu0 %1301
    %v1303 = vsel %vm496, %v1300, %v1302
    %v1304 = vsel %vm496, %v1302, %v1300
    %s1305 = scalar_lea.vmem %s3, 40
    %v1306 = vld [vmem:[%s1305] sm:$0xff]
    %v1307 = vmul.f32 %v1303, %v504
    %v1308 = vmul.f32 %v1304, %v508
    %v1310 = vsel %vm58, %v1306, 0
    %1312 = vmatprep.subr.mxu0 %v1308
    %1313 = vmatpush1.msra.mxu0 %v1307
    %1314 = vmatprep.subr.mxu0 0.0
    %1315 = vmatpush1.msra.mxu0 0.0
    %1316 = vmatprep.subr.mxu0 0.0
    %1317 = vmatpush1.msra.mxu0 0.0
    %1318 = vmatprep.subr.mxu0 0.0
    %1319 = vmatpush1.msra.mxu0 0.0
    %1320 = vmatprep.subr.mxu0 0.0
    %1321 = vmatpush1.msra.mxu0 0.0
    %1322 = vmatprep.subr.mxu0 0.0
    %1323 = vmatpush1.msra.mxu0 0.0
    %1324 = vmatprep.subr.mxu0 0.0
    %1325 = vmatpush1.msra.mxu0 0.0
    %1326 = vmatprep.subr.mxu0 0.0
    %1327 = vmatpush1.msra.mxu0 0.0
    %1328 = vmatprep.subr.mxu0 0.0
    %1329 = vmatpush1.msra.mxu0 0.0
    %1330 = vmatprep.subr.mxu0 0.0
    %1331 = vmatpush1.msra.mxu0 0.0
    %1332 = vmatprep.subr.mxu0 0.0
    %1333 = vmatpush1.msra.mxu0 0.0
    %1334 = vmatprep.subr.mxu0 0.0
    %1335 = vmatpush1.msra.mxu0 0.0
    %1336 = vmatprep.subr.mxu0 0.0
    %1337 = vmatpush1.msra.mxu0 0.0
    %1338 = vmatprep.subr.mxu0 0.0
    %1339 = vmatpush1.msra.mxu0 0.0
    %1340 = vmatprep.subr.mxu0 0.0
    %1341 = vmatpush1.msra.mxu0 0.0
    %1342 = vmatprep.subr.mxu0 0.0
    %1343 = vmatpush1.msra.mxu0 0.0
    %1344 = vmatprep.subr.mxu0 0.0
    %1345 = vmatpush1.msra.mxu0 0.0
    %1346 = vmatprep.subr.mxu0 0.0
    %1347 = vmatpush1.msra.mxu0 0.0
    %1348 = vmatprep.subr.mxu0 0.0
    %1349 = vmatpush1.msra.mxu0 0.0
    %1350 = vmatprep.subr.mxu0 0.0
    %1351 = vmatpush1.msra.mxu0 0.0
    %1352 = vmatprep.subr.mxu0 0.0
    %1353 = vmatpush1.msra.mxu0 0.0
    %1354 = vmatprep.subr.mxu0 0.0
    %1355 = vmatpush1.msra.mxu0 0.0
    %1356 = vmatprep.subr.mxu0 0.0
    %1357 = vmatpush1.msra.mxu0 0.0
    %1358 = vmatprep.subr.mxu0 0.0
    %1359 = vmatpush1.msra.mxu0 0.0
    %1360 = vmatprep.subr.mxu0 0.0
    %1361 = vmatpush1.msra.mxu0 0.0
    %1362 = vmatprep.subr.mxu0 0.0
    %1363 = vmatpush1.msra.mxu0 0.0
    %1364 = vmatprep.subr.mxu0 0.0
    %1365 = vmatpush1.msra.mxu0 0.0
    %1366 = vmatprep.subr.mxu0 0.0
    %1367 = vmatpush1.msra.mxu0 0.0
    %1368 = vmatprep.subr.mxu0 0.0
    %1369 = vmatpush1.msra.mxu0 0.0
    %1370 = vmatprep.subr.mxu0 0.0
    %1371 = vmatpush1.msra.mxu0 0.0
    %1372 = vmatprep.subr.mxu0 0.0
    %1373 = vmatpush1.msra.mxu0 0.0
    %1374 = vmatprep.subr.mxu0 0.0
    %1375 = vmatpush1.msra.mxu0 0.0
    %1376 = vmatprep.mubr.f32.mxu0 0.0
    %1377 = vmatmul.mubr.f32.gmra.mrb[0].mxu0 %v1310
    %v1378 = vpop.f32.mrb[0].mxu0
    %v1379 = vadd.f32 0.0, %v1378
    %v1380 = vpop.f32.mrb[0].mxu0
    %v1381 = vadd.f32 0.0, %v1380
    %1382 = vdwg.mxu0
    %v1383 = vadd.f32 %v1297, %v1379
    %v1384 = vadd.f32 %v1298, %v1381
    %1385 = vrot.lane.b32.xlu0 %v880, 113
    %v1386 = vpop.permute.xlu0 %1385
    %1387 = vrot.lane.b32.xlu0 %v881, 113
    %v1388 = vpop.permute.xlu0 %1387
    %v1389 = vsel %vm591, %v1386, %v1388
    %v1390 = vsel %vm591, %v1388, %v1386
    %s1391 = scalar_lea.vmem %s3, 48
    %v1392 = vld [vmem:[%s1391] sm:$0xff]
    %v1393 = vmul.f32 %v1389, %v599
    %v1394 = vmul.f32 %v1390, %v603
    %v1396 = vsel %vm58, %v1392, 0
    %1398 = vmatprep.subr.mxu0 %v1394
    %1399 = vmatpush1.msra.mxu0 %v1393
    %1400 = vmatprep.subr.mxu0 0.0
    %1401 = vmatpush1.msra.mxu0 0.0
    %1402 = vmatprep.subr.mxu0 0.0
    %1403 = vmatpush1.msra.mxu0 0.0
    %1404 = vmatprep.subr.mxu0 0.0
    %1405 = vmatpush1.msra.mxu0 0.0
    %1406 = vmatprep.subr.mxu0 0.0
    %1407 = vmatpush1.msra.mxu0 0.0
    %1408 = vmatprep.subr.mxu0 0.0
    %1409 = vmatpush1.msra.mxu0 0.0
    %1410 = vmatprep.subr.mxu0 0.0
    %1411 = vmatpush1.msra.mxu0 0.0
    %1412 = vmatprep.subr.mxu0 0.0
    %1413 = vmatpush1.msra.mxu0 0.0
    %1414 = vmatprep.subr.mxu0 0.0
    %1415 = vmatpush1.msra.mxu0 0.0
    %1416 = vmatprep.subr.mxu0 0.0
    %1417 = vmatpush1.msra.mxu0 0.0
    %1418 = vmatprep.subr.mxu0 0.0
    %1419 = vmatpush1.msra.mxu0 0.0
    %1420 = vmatprep.subr.mxu0 0.0
    %1421 = vmatpush1.msra.mxu0 0.0
    %1422 = vmatprep.subr.mxu0 0.0
    %1423 = vmatpush1.msra.mxu0 0.0
    %1424 = vmatprep.subr.mxu0 0.0
    %1425 = vmatpush1.msra.mxu0 0.0
    %1426 = vmatprep.subr.mxu0 0.0
    %1427 = vmatpush1.msra.mxu0 0.0
    %1428 = vmatprep.subr.mxu0 0.0
    %1429 = vmatpush1.msra.mxu0 0.0
    %1430 = vmatprep.subr.mxu0 0.0
    %1431 = vmatpush1.msra.mxu0 0.0
    %1432 = vmatprep.subr.mxu0 0.0
    %1433 = vmatpush1.msra.mxu0 0.0
    %1434 = vmatprep.subr.mxu0 0.0
    %1435 = vmatpush1.msra.mxu0 0.0
    %1436 = vmatprep.subr.mxu0 0.0
    %1437 = vmatpush1.msra.mxu0 0.0
    %1438 = vmatprep.subr.mxu0 0.0
    %1439 = vmatpush1.msra.mxu0 0.0
    %1440 = vmatprep.subr.mxu0 0.0
    %1441 = vmatpush1.msra.mxu0 0.0
    %1442 = vmatprep.subr.mxu0 0.0
    %1443 = vmatpush1.msra.mxu0 0.0
    %1444 = vmatprep.subr.mxu0 0.0
    %1445 = vmatpush1.msra.mxu0 0.0
    %1446 = vmatprep.subr.mxu0 0.0
    %1447 = vmatpush1.msra.mxu0 0.0
    %1448 = vmatprep.subr.mxu0 0.0
    %1449 = vmatpush1.msra.mxu0 0.0
    %1450 = vmatprep.subr.mxu0 0.0
    %1451 = vmatpush1.msra.mxu0 0.0
    %1452 = vmatprep.subr.mxu0 0.0
    %1453 = vmatpush1.msra.mxu0 0.0
    %1454 = vmatprep.subr.mxu0 0.0
    %1455 = vmatpush1.msra.mxu0 0.0
    %1456 = vmatprep.subr.mxu0 0.0
    %1457 = vmatpush1.msra.mxu0 0.0
    %1458 = vmatprep.subr.mxu0 0.0
    %1459 = vmatpush1.msra.mxu0 0.0
    %1460 = vmatprep.subr.mxu0 0.0
    %1461 = vmatpush1.msra.mxu0 0.0
    %1462 = vmatprep.mubr.f32.mxu0 0.0
    %1463 = vmatmul.mubr.f32.gmra.mrb[0].mxu0 %v1396
    %v1464 = vpop.f32.mrb[0].mxu0
    %v1465 = vadd.f32 0.0, %v1464
    %v1466 = vpop.f32.mrb[0].mxu0
    %v1467 = vadd.f32 0.0, %v1466
    %1468 = vdwg.mxu0
    %v1469 = vadd.f32 %v1383, %v1465
    %v1470 = vadd.f32 %v1384, %v1467
    %1471 = vrot.lane.b32.xlu0 %v880, 112
    %v1472 = vpop.permute.xlu0 %1471
    %1473 = vrot.lane.b32.xlu0 %v881, 112
    %v1474 = vpop.permute.xlu0 %1473
    %v1475 = vsel %vm686, %v1472, %v1474
    %v1476 = vsel %vm686, %v1474, %v1472
    %s1477 = scalar_lea.vmem %s3, 56
    %v1478 = vld [vmem:[%s1477] sm:$0xff]
    %v1479 = vmul.f32 %v1475, %v694
    %v1480 = vmul.f32 %v1476, %v698
    %v1482 = vsel %vm58, %v1478, 0
    %1484 = vmatprep.subr.mxu0 %v1480
    %1485 = vmatpush1.msra.mxu0 %v1479
    %1486 = vmatprep.subr.mxu0 0.0
    %1487 = vmatpush1.msra.mxu0 0.0
    %1488 = vmatprep.subr.mxu0 0.0
    %1489 = vmatpush1.msra.mxu0 0.0
    %1490 = vmatprep.subr.mxu0 0.0
    %1491 = vmatpush1.msra.mxu0 0.0
    %1492 = vmatprep.subr.mxu0 0.0
    %1493 = vmatpush1.msra.mxu0 0.0
    %1494 = vmatprep.subr.mxu0 0.0
    %1495 = vmatpush1.msra.mxu0 0.0
    %1496 = vmatprep.subr.mxu0 0.0
    %1497 = vmatpush1.msra.mxu0 0.0
    %1498 = vmatprep.subr.mxu0 0.0
    %1499 = vmatpush1.msra.mxu0 0.0
    %1500 = vmatprep.subr.mxu0 0.0
    %1501 = vmatpush1.msra.mxu0 0.0
    %1502 = vmatprep.subr.mxu0 0.0
    %1503 = vmatpush1.msra.mxu0 0.0
    %1504 = vmatprep.subr.mxu0 0.0
    %1505 = vmatpush1.msra.mxu0 0.0
    %1506 = vmatprep.subr.mxu0 0.0
    %1507 = vmatpush1.msra.mxu0 0.0
    %1508 = vmatprep.subr.mxu0 0.0
    %1509 = vmatpush1.msra.mxu0 0.0
    %1510 = vmatprep.subr.mxu0 0.0
    %1511 = vmatpush1.msra.mxu0 0.0
    %1512 = vmatprep.subr.mxu0 0.0
    %1513 = vmatpush1.msra.mxu0 0.0
    %1514 = vmatprep.subr.mxu0 0.0
    %1515 = vmatpush1.msra.mxu0 0.0
    %1516 = vmatprep.subr.mxu0 0.0
    %1517 = vmatpush1.msra.mxu0 0.0
    %1518 = vmatprep.subr.mxu0 0.0
    %1519 = vmatpush1.msra.mxu0 0.0
    %1520 = vmatprep.subr.mxu0 0.0
    %1521 = vmatpush1.msra.mxu0 0.0
    %1522 = vmatprep.subr.mxu0 0.0
    %1523 = vmatpush1.msra.mxu0 0.0
    %1524 = vmatprep.subr.mxu0 0.0
    %1525 = vmatpush1.msra.mxu0 0.0
    %1526 = vmatprep.subr.mxu0 0.0
    %1527 = vmatpush1.msra.mxu0 0.0
    %1528 = vmatprep.subr.mxu0 0.0
    %1529 = vmatpush1.msra.mxu0 0.0
    %1530 = vmatprep.subr.mxu0 0.0
    %1531 = vmatpush1.msra.mxu0 0.0
    %1532 = vmatprep.subr.mxu0 0.0
    %1533 = vmatpush1.msra.mxu0 0.0
    %1534 = vmatprep.subr.mxu0 0.0
    %1535 = vmatpush1.msra.mxu0 0.0
    %1536 = vmatprep.subr.mxu0 0.0
    %1537 = vmatpush1.msra.mxu0 0.0
    %1538 = vmatprep.subr.mxu0 0.0
    %1539 = vmatpush1.msra.mxu0 0.0
    %1540 = vmatprep.subr.mxu0 0.0
    %1541 = vmatpush1.msra.mxu0 0.0
    %1542 = vmatprep.subr.mxu0 0.0
    %1543 = vmatpush1.msra.mxu0 0.0
    %1544 = vmatprep.subr.mxu0 0.0
    %1545 = vmatpush1.msra.mxu0 0.0
    %1546 = vmatprep.subr.mxu0 0.0
    %1547 = vmatpush1.msra.mxu0 0.0
    %1548 = vmatprep.mubr.f32.mxu0 0.0
    %1549 = vmatmul.mubr.f32.gmra.mrb[0].mxu0 %v1482
    %v1550 = vpop.f32.mrb[0].mxu0
    %v1551 = vadd.f32 0.0, %v1550
    %v1552 = vpop.f32.mrb[0].mxu0
    %v1553 = vadd.f32 0.0, %v1552
    %1554 = vdwg.mxu0
    %v1555 = vadd.f32 %v1469, %v1551
    %v1556 = vadd.f32 %v1470, %v1553
    %1557 = vrot.lane.b32.xlu0 %v880, 111
    %v1558 = vpop.permute.xlu0 %1557
    %1559 = vrot.lane.b32.xlu0 %v881, 111
    %v1560 = vpop.permute.xlu0 %1559
    %v1561 = vsel %vm781, %v1558, %v1560
    %v1562 = vsel %vm781, %v1560, %v1558
    %s1563 = scalar_lea.vmem %s3, 64
    %v1564 = vld [vmem:[%s1563] sm:$0xff]
    %v1565 = vmul.f32 %v1561, %v789
    %v1566 = vmul.f32 %v1562, %v793
    %v1568 = vsel %vm58, %v1564, 0
    %1570 = vmatprep.subr.mxu0 %v1566
    %1571 = vmatpush1.msra.mxu0 %v1565
    %1572 = vmatprep.subr.mxu0 0.0
    %1573 = vmatpush1.msra.mxu0 0.0
    %1574 = vmatprep.subr.mxu0 0.0
    %1575 = vmatpush1.msra.mxu0 0.0
    %1576 = vmatprep.subr.mxu0 0.0
    %1577 = vmatpush1.msra.mxu0 0.0
    %1578 = vmatprep.subr.mxu0 0.0
    %1579 = vmatpush1.msra.mxu0 0.0
    %1580 = vmatprep.subr.mxu0 0.0
    %1581 = vmatpush1.msra.mxu0 0.0
    %1582 = vmatprep.subr.mxu0 0.0
    %1583 = vmatpush1.msra.mxu0 0.0
    %1584 = vmatprep.subr.mxu0 0.0
    %1585 = vmatpush1.msra.mxu0 0.0
    %1586 = vmatprep.subr.mxu0 0.0
    %1587 = vmatpush1.msra.mxu0 0.0
    %1588 = vmatprep.subr.mxu0 0.0
    %1589 = vmatpush1.msra.mxu0 0.0
    %1590 = vmatprep.subr.mxu0 0.0
    %1591 = vmatpush1.msra.mxu0 0.0
    %1592 = vmatprep.subr.mxu0 0.0
    %1593 = vmatpush1.msra.mxu0 0.0
    %1594 = vmatprep.subr.mxu0 0.0
    %1595 = vmatpush1.msra.mxu0 0.0
    %1596 = vmatprep.subr.mxu0 0.0
    %1597 = vmatpush1.msra.mxu0 0.0
    %1598 = vmatprep.subr.mxu0 0.0
    %1599 = vmatpush1.msra.mxu0 0.0
    %1600 = vmatprep.subr.mxu0 0.0
    %1601 = vmatpush1.msra.mxu0 0.0
    %1602 = vmatprep.subr.mxu0 0.0
    %1603 = vmatpush1.msra.mxu0 0.0
    %1604 = vmatprep.subr.mxu0 0.0
    %1605 = vmatpush1.msra.mxu0 0.0
    %1606 = vmatprep.subr.mxu0 0.0
    %1607 = vmatpush1.msra.mxu0 0.0
    %1608 = vmatprep.subr.mxu0 0.0
    %1609 = vmatpush1.msra.mxu0 0.0
    %1610 = vmatprep.subr.mxu0 0.0
    %1611 = vmatpush1.msra.mxu0 0.0
    %1612 = vmatprep.subr.mxu0 0.0
    %1613 = vmatpush1.msra.mxu0 0.0
    %1614 = vmatprep.subr.mxu0 0.0
    %1615 = vmatpush1.msra.mxu0 0.0
    %1616 = vmatprep.subr.mxu0 0.0
    %1617 = vmatpush1.msra.mxu0 0.0
    %1618 = vmatprep.subr.mxu0 0.0
    %1619 = vmatpush1.msra.mxu0 0.0
    %1620 = vmatprep.subr.mxu0 0.0
    %1621 = vmatpush1.msra.mxu0 0.0
    %1622 = vmatprep.subr.mxu0 0.0
    %1623 = vmatpush1.msra.mxu0 0.0
    %1624 = vmatprep.subr.mxu0 0.0
    %1625 = vmatpush1.msra.mxu0 0.0
    %1626 = vmatprep.subr.mxu0 0.0
    %1627 = vmatpush1.msra.mxu0 0.0
    %1628 = vmatprep.subr.mxu0 0.0
    %1629 = vmatpush1.msra.mxu0 0.0
    %1630 = vmatprep.subr.mxu0 0.0
    %1631 = vmatpush1.msra.mxu0 0.0
    %1632 = vmatprep.subr.mxu0 0.0
    %1633 = vmatpush1.msra.mxu0 0.0
    %1634 = vmatprep.mubr.f32.mxu0 0.0
    %1635 = vmatmul.mubr.f32.gmra.mrb[0].mxu0 %v1568
    %v1636 = vpop.f32.mrb[0].mxu0
    %v1637 = vadd.f32 0.0, %v1636
    %v1638 = vpop.f32.mrb[0].mxu0
    %v1639 = vadd.f32 0.0, %v1638
    %1640 = vdwg.mxu0
    %v1641 = vadd.f32 %v1555, %v1637
    %v1642 = vadd.f32 %v1556, %v1639
    %v1643 = vld [vmem:[%s4] sm:$0xff]
    %1645 = vset.pattern.permute.xlu0 0
    %1646 = vperm.xlu0 %1645, %v1643
    %v1647 = vpop.permute.xlu0 %1646
    %v1649 = vadd.f32 %v1641, %v1647
    %v1650 = vadd.f32 %v1642, %v1647
    %v1651 = vmax.f32 %v1649, 0.0
    %v1652 = vmax.f32 %v1650, 0.0
    %v1653 = vadd.f32 %v1651, %v1652
    %1654 = vadd.xlane.f32.xlu0 %v1653
    %v1655 = vpop.xlane.xlu0 %1654
    %v1656 = vmul.f32 %v1655, 0.00390625
    %v1657 = vld [vmem:[%s5] sm:$0xff]
    %v1659 = vsel %vm58, %v1657, 0
    %1661 = vmatprep.subr.mxu0 0.0
    %1662 = vmatpush1.msra.mxu0 %v1656
    %1663 = vmatprep.subr.mxu0 0.0
    %1664 = vmatpush1.msra.mxu0 0.0
    %1665 = vmatprep.subr.mxu0 0.0
    %1666 = vmatpush1.msra.mxu0 0.0
    %1667 = vmatprep.subr.mxu0 0.0
    %1668 = vmatpush1.msra.mxu0 0.0
    %1669 = vmatprep.subr.mxu0 0.0
    %1670 = vmatpush1.msra.mxu0 0.0
    %1671 = vmatprep.subr.mxu0 0.0
    %1672 = vmatpush1.msra.mxu0 0.0
    %1673 = vmatprep.subr.mxu0 0.0
    %1674 = vmatpush1.msra.mxu0 0.0
    %1675 = vmatprep.subr.mxu0 0.0
    %1676 = vmatpush1.msra.mxu0 0.0
    %1677 = vmatprep.subr.mxu0 0.0
    %1678 = vmatpush1.msra.mxu0 0.0
    %1679 = vmatprep.subr.mxu0 0.0
    %1680 = vmatpush1.msra.mxu0 0.0
    %1681 = vmatprep.subr.mxu0 0.0
    %1682 = vmatpush1.msra.mxu0 0.0
    %1683 = vmatprep.subr.mxu0 0.0
    %1684 = vmatpush1.msra.mxu0 0.0
    %1685 = vmatprep.subr.mxu0 0.0
    %1686 = vmatpush1.msra.mxu0 0.0
    %1687 = vmatprep.subr.mxu0 0.0
    %1688 = vmatpush1.msra.mxu0 0.0
    %1689 = vmatprep.subr.mxu0 0.0
    %1690 = vmatpush1.msra.mxu0 0.0
    %1691 = vmatprep.subr.mxu0 0.0
    %1692 = vmatpush1.msra.mxu0 0.0
    %1693 = vmatprep.subr.mxu0 0.0
    %1694 = vmatpush1.msra.mxu0 0.0
    %1695 = vmatprep.subr.mxu0 0.0
    %1696 = vmatpush1.msra.mxu0 0.0
    %1697 = vmatprep.subr.mxu0 0.0
    %1698 = vmatpush1.msra.mxu0 0.0
    %1699 = vmatprep.subr.mxu0 0.0
    %1700 = vmatpush1.msra.mxu0 0.0
    %1701 = vmatprep.subr.mxu0 0.0
    %1702 = vmatpush1.msra.mxu0 0.0
    %1703 = vmatprep.subr.mxu0 0.0
    %1704 = vmatpush1.msra.mxu0 0.0
    %1705 = vmatprep.subr.mxu0 0.0
    %1706 = vmatpush1.msra.mxu0 0.0
    %1707 = vmatprep.subr.mxu0 0.0
    %1708 = vmatpush1.msra.mxu0 0.0
    %1709 = vmatprep.subr.mxu0 0.0
    %1710 = vmatpush1.msra.mxu0 0.0
    %1711 = vmatprep.subr.mxu0 0.0
    %1712 = vmatpush1.msra.mxu0 0.0
    %1713 = vmatprep.subr.mxu0 0.0
    %1714 = vmatpush1.msra.mxu0 0.0
    %1715 = vmatprep.subr.mxu0 0.0
    %1716 = vmatpush1.msra.mxu0 0.0
    %1717 = vmatprep.subr.mxu0 0.0
    %1718 = vmatpush1.msra.mxu0 0.0
    %1719 = vmatprep.subr.mxu0 0.0
    %1720 = vmatpush1.msra.mxu0 0.0
    %1721 = vmatprep.subr.mxu0 0.0
    %1722 = vmatpush1.msra.mxu0 0.0
    %1723 = vmatprep.subr.mxu0 0.0
    %1724 = vmatpush1.msra.mxu0 0.0
    %1725 = vmatprep.mubr.f32.mxu0 0.0
    %1726 = vmatmul.mubr.f32.gmra.mrb[0].mxu0 %v1659
    %v1727 = vpop.f32.mrb[0].mxu0
    %v1728 = vadd.f32 0.0, %v1727
    %v1729 = vpop.f32.mrb[0].mxu0
    %1730 = vdwg.mxu0
    %v1731 = vmax.f32 %v1728, 0.0
    %v1732 = vld [vmem:[%s6] sm:$0xff]
    %v1734 = vsel %vm58, %v1732, 0
    %1736 = vmatprep.subr.mxu0 0.0
    %1737 = vmatpush1.msra.mxu0 %v1731
    %1738 = vmatprep.subr.mxu0 0.0
    %1739 = vmatpush1.msra.mxu0 0.0
    %1740 = vmatprep.subr.mxu0 0.0
    %1741 = vmatpush1.msra.mxu0 0.0
    %1742 = vmatprep.subr.mxu0 0.0
    %1743 = vmatpush1.msra.mxu0 0.0
    %1744 = vmatprep.subr.mxu0 0.0
    %1745 = vmatpush1.msra.mxu0 0.0
    %1746 = vmatprep.subr.mxu0 0.0
    %1747 = vmatpush1.msra.mxu0 0.0
    %1748 = vmatprep.subr.mxu0 0.0
    %1749 = vmatpush1.msra.mxu0 0.0
    %1750 = vmatprep.subr.mxu0 0.0
    %1751 = vmatpush1.msra.mxu0 0.0
    %1752 = vmatprep.subr.mxu0 0.0
    %1753 = vmatpush1.msra.mxu0 0.0
    %1754 = vmatprep.subr.mxu0 0.0
    %1755 = vmatpush1.msra.mxu0 0.0
    %1756 = vmatprep.subr.mxu0 0.0
    %1757 = vmatpush1.msra.mxu0 0.0
    %1758 = vmatprep.subr.mxu0 0.0
    %1759 = vmatpush1.msra.mxu0 0.0
    %1760 = vmatprep.subr.mxu0 0.0
    %1761 = vmatpush1.msra.mxu0 0.0
    %1762 = vmatprep.subr.mxu0 0.0
    %1763 = vmatpush1.msra.mxu0 0.0
    %1764 = vmatprep.subr.mxu0 0.0
    %1765 = vmatpush1.msra.mxu0 0.0
    %1766 = vmatprep.subr.mxu0 0.0
    %1767 = vmatpush1.msra.mxu0 0.0
    %1768 = vmatprep.subr.mxu0 0.0
    %1769 = vmatpush1.msra.mxu0 0.0
    %1770 = vmatprep.subr.mxu0 0.0
    %1771 = vmatpush1.msra.mxu0 0.0
    %1772 = vmatprep.subr.mxu0 0.0
    %1773 = vmatpush1.msra.mxu0 0.0
    %1774 = vmatprep.subr.mxu0 0.0
    %1775 = vmatpush1.msra.mxu0 0.0
    %1776 = vmatprep.subr.mxu0 0.0
    %1777 = vmatpush1.msra.mxu0 0.0
    %1778 = vmatprep.subr.mxu0 0.0
    %1779 = vmatpush1.msra.mxu0 0.0
    %1780 = vmatprep.subr.mxu0 0.0
    %1781 = vmatpush1.msra.mxu0 0.0
    %1782 = vmatprep.subr.mxu0 0.0
    %1783 = vmatpush1.msra.mxu0 0.0
    %1784 = vmatprep.subr.mxu0 0.0
    %1785 = vmatpush1.msra.mxu0 0.0
    %1786 = vmatprep.subr.mxu0 0.0
    %1787 = vmatpush1.msra.mxu0 0.0
    %1788 = vmatprep.subr.mxu0 0.0
    %1789 = vmatpush1.msra.mxu0 0.0
    %1790 = vmatprep.subr.mxu0 0.0
    %1791 = vmatpush1.msra.mxu0 0.0
    %1792 = vmatprep.subr.mxu0 0.0
    %1793 = vmatpush1.msra.mxu0 0.0
    %1794 = vmatprep.subr.mxu0 0.0
    %1795 = vmatpush1.msra.mxu0 0.0
    %1796 = vmatprep.subr.mxu0 0.0
    %1797 = vmatpush1.msra.mxu0 0.0
    %1798 = vmatprep.subr.mxu0 0.0
    %1799 = vmatpush1.msra.mxu0 0.0
    %1800 = vmatprep.mubr.f32.mxu0 0.0
    %1801 = vmatmul.mubr.f32.gmra.mrb[0].mxu0 %v1734
    %v1802 = vpop.f32.mrb[0].mxu0
    %v1803 = vadd.f32 0.0, %v1802
    %v1804 = vpop.f32.mrb[0].mxu0
    %1805 = vdwg.mxu0
    %v1806 = vxor.u32 %v1803, 2147483648
    %v1807 = vmul.f32 %v1806, 1.442695
    %v1808 = vpow.pop %v1807
    %v1809 = vadd.f32 %v1808, 1.0
    %v1810 = vrcp.pop %v1809
    %v1811 = vmul.f32 1.0, %v1810
    %1813 = vset.pattern.permute.xlu0 0
    %1814 = vperm.xlu0 %1813, %v1811
    %v1815 = vpop.permute.xlu0 %1814
    %v1817 = vmul.f32 %v1651, %v1815
    %v1818 = vmul.f32 %v1652, %v1815
    %v1819 = vadd.f32 %v30, %v1817
    %v1820 = vadd.f32 %v31, %v1818
    %1821 = vst [vmem:[#allocation2] sm:$0xff] %v1819
    %1822 = vst [vmem:[#allocation2 + $0x8] sm:$0xff] %v1820
    // Predicated region
    $region34: #{tpu_custom_call.1} parent=1 // pred_check
      _
    $region35: #{tpu_custom_call.1} parent=1 // pred_check_branch
      %1824 = sbr.rel (0) target = $region37
    $region36: #{tpu_custom_call.1} parent=1 // pred_region
      %s1826 = ssub.s32 256, 256
      %1827 = vsyncadd [#allocation3], %s1826
      %s1829 = sshll.u32 [#allocation2], 4
      %s1830 = int_to_ptr.vmem [resolvable:$true] %s1829
      %1832 = dma.vmem_to_hbm [thread:$0]  %s1830, 256, %s8, [#allocation3]
    $region37: #{tpu_custom_call.1} parent=1 // pred_fallthru
      _
    // Predicated region
    $region38: #{tpu_custom_call.1} parent=1 // pred_check
      _
    $region39: #{tpu_custom_call.1} parent=1 // pred_check_branch
      %1834 = sbr.rel (0) target = $region41
    $region40: #{tpu_custom_call.1} parent=1 // pred_region
      %1835 = dma.done [#allocation3], 256
    $region41: #{tpu_custom_call.1} parent=1 // pred_fallthru
      _
    %1836 = vsyncpa [#allocation3], 1

</llo_original>
